<compile_context>
chip_gen: v7x
topology: tpu7x:2x2x1
jax: 0.10.0
libtpu: 0.0.40
codegen_flags: <defaults>
</compile_context>

<pallas_src>
import jax
import jax.numpy as jnp
import numpy as np
from jax.experimental import pallas as pl
from jax.experimental.pallas import tpu as pltpu


# --------------------------------------------------------------------------
# Kernels
# --------------------------------------------------------------------------
def _matmul_t_kernel_f32out(x_ref, y_ref, o_ref):
    """f32 output path: accumulate directly into the resident output block."""
    k = pl.program_id(2)

    @pl.when(k == 0)
    def _():
        o_ref[...] = jnp.zeros_like(o_ref)

    # Contract last dims of both operands: (bm, bk) x (bn, bk) -> (bm, bn).
    o_ref[...] += jax.lax.dot_general(
        x_ref[...], y_ref[...],
        dimension_numbers=(((1,), (1,)), ((), ())),
        preferred_element_type=jnp.float32)


def _matmul_t_kernel_scratch(x_ref, y_ref, o_ref, acc_ref):
    """Narrow-output path: f32 VMEM accumulator, cast on the last K step."""
    k = pl.program_id(2)

    @pl.when(k == 0)
    def _():
        acc_ref[...] = jnp.zeros_like(acc_ref)

    acc_ref[...] += jax.lax.dot_general(
        x_ref[...], y_ref[...],
        dimension_numbers=(((1,), (1,)), ((), ())),
        preferred_element_type=jnp.float32)

    @pl.when(k == pl.num_programs(2) - 1)
    def _():
        o_ref[...] = acc_ref[...].astype(o_ref.dtype)


# --------------------------------------------------------------------------
# Tile selection helpers
# --------------------------------------------------------------------------
def _round_up(a, b):
    return -(-a // b) * b


def _pick_tile(dim, max_tile, align=128):
    """Pick a tile size (multiple of `align`, <= max_tile) minimizing padding.

    Among 128-aligned candidates up to max_tile, choose the one that minimizes
    round_up(round_up(dim, align), candidate); prefer the largest candidate on
    ties (bigger tiles -> higher arithmetic intensity).  This avoids e.g.
    padding M=384 up to 512 with a fixed 256 tile.
    """
    dp = _round_up(dim, align)
    max_tile = max(align, _round_up(min(max_tile, dp), align))
    best = align
    best_pad = _round_up(dp, align)
    for cand in range(align, max_tile + 1, align):
        padded = _round_up(dp, cand)
        if padded < best_pad or (padded == best_pad and cand > best):
            best, best_pad = cand, padded
    return best


# --------------------------------------------------------------------------
# Wrapper
# --------------------------------------------------------------------------
def linear_matmul_t(x, y, *, bm=512, bn=1024, bk=512):
    """Computes x @ y.T with a tiled Pallas TPU kernel.

    x: (M, K), y: (N, K)  ->  (M, N)
    Arbitrary shapes handled by zero-padding up to tile multiples (zero-padded
    K columns contribute nothing; padded M/N rows/cols are sliced off).
    """
    M, K = x.shape
    N, K2 = y.shape
    assert K == K2, f"contraction dims must match, got {K} vs {K2}"

    out_dtype = jnp.result_type(x.dtype, y.dtype)

    # Tile sizes: 128-aligned (lane/sublane + MXU friendly), clamped to the
    # padded problem, chosen to minimize padding of each dimension.
    bm = _pick_tile(M, bm)
    bn = _pick_tile(N, bn)
    bk = _pick_tile(K, bk)

    Mp = _round_up(M, bm)
    Np = _round_up(N, bn)
    Kp = _round_up(K, bk)

    xp = x if (Mp == M and Kp == K) else jnp.pad(x, ((0, Mp - M), (0, Kp - K)))
    yp = y if (Np == N and Kp == K) else jnp.pad(y, ((0, Np - N), (0, Kp - K)))

    grid = (Mp // bm, Np // bn, Kp // bk)

    in_bytes = jnp.dtype(x.dtype).itemsize
    out_bytes = jnp.dtype(out_dtype).itemsize

    f32_out = out_dtype == jnp.float32
    if f32_out:
        kernel = _matmul_t_kernel_f32out
        scratch_shapes = []
        scratch_bytes = 0
    else:
        kernel = _matmul_t_kernel_scratch
        scratch_shapes = [pltpu.VMEM((bm, bn), jnp.float32)]
        scratch_bytes = bm * bn * 4

    # Rough double-buffered VMEM footprint -> scoped VMEM limit (cap at 64 MiB
    # so it stays within v7x physical VMEM; plenty for v5e/v6e too).
    vmem_est = (2 * (bm * bk + bn * bk) * in_bytes
                + 2 * bm * bn * out_bytes + scratch_bytes)
    vmem_limit = int(min(64 << 20, max(32 << 20, 2 * vmem_est)))

    cost = pl.CostEstimate(
        flops=2 * M * N * K,
        bytes_accessed=(M * K + N * K) * in_bytes + M * N * out_bytes,
        transcendentals=0)

    out = pl.pallas_call(
        kernel,
        out_shape=jax.ShapeDtypeStruct((Mp, Np), out_dtype),
        grid_spec=pltpu.PrefetchScalarGridSpec(
            num_scalar_prefetch=0,
            grid=grid,
            in_specs=[
                pl.BlockSpec((bm, bk), lambda i, j, k: (i, k)),
                pl.BlockSpec((bn, bk), lambda i, j, k: (j, k)),
            ],
            out_specs=pl.BlockSpec((bm, bn), lambda i, j, k: (i, j)),
            scratch_shapes=scratch_shapes,
        ),
        compiler_params=pltpu.CompilerParams(
            dimension_semantics=("parallel", "parallel", "arbitrary"),
            vmem_limit_bytes=vmem_limit),
        cost_estimate=cost,
    )(xp, yp)

    if Mp != M or Np != N:
        out = out[:M, :N]
    return out


class Linear:
    """JAX/Pallas port of the PyTorch module: forward((x, y)) = x @ y.T."""

    def __call__(self, inputs):
        x, y = inputs
        return linear_matmul_t(x, y)


if __name__ == "__main__":
    # Small shapes consistent with the module's forward (x: (M, K), y: (N, K)).
    # M=384 exercises the non-power-of-two tile pick (bm=384, no padding),
    # N=200 exercises output padding/slicing.
    M, K, N = 384, 512, 200

    key = jax.random.PRNGKey(0)
    kx, ky = jax.random.split(key)
    x = jax.random.normal(kx, (M, K), dtype=jnp.float32)
    y = jax.random.normal(ky, (N, K), dtype=jnp.float32)

    mod = Linear()
    out = mod((x, y))
    out = jax.block_until_ready(out)

    # Reference in float64 (independent of TPU matmul precision defaults).
    ref = np.asarray(x, dtype=np.float64) @ np.asarray(y, dtype=np.float64).T
    np.testing.assert_allclose(np.asarray(out, dtype=np.float64), ref,
                               rtol=2e-3, atol=2e-3)
    print("KERNEL_OK")
</pallas_src>

<mosaic_0001>
module attributes {stable_mosaic.version = 11 : i64} {
  func.func @_matmul_t_kernel_f32out(%arg0: i32, %arg1: i32, %arg2: i32, %arg3: memref<384x512xf32, #tpu.memory_space<vmem>>, %arg4: memref<256x512xf32, #tpu.memory_space<vmem>>, %arg5: memref<384x256xf32, #tpu.memory_space<vmem>>) attributes {dimension_semantics = [#tpu.dimension_semantics<parallel>, #tpu.dimension_semantics<parallel>, #tpu.dimension_semantics<arbitrary>], iteration_bounds = array<i64: 1, 1, 1>, scalar_prefetch = 0 : i64, scratch_operands = 0 : i64, tpu.core_type = #tpu.core_type<tc>, window_params = [{transform_indices = @transform_0, window_bounds = array<i64: 384, 512>}, {transform_indices = @transform_1, window_bounds = array<i64: 256, 512>}, {transform_indices = @transform_2, window_bounds = array<i64: 384, 256>}]} {
    %c0_i32 = arith.constant 0 : i32
    %0 = arith.cmpi eq, %arg2, %c0_i32 : i32
    %1 = arith.extui %0 : i1 to i32
    %c0_i32_0 = arith.constant 0 : i32
    %2 = arith.cmpi ne, %1, %c0_i32_0 : i32
    scf.if %2 {
      %cst_8 = arith.constant 0.000000e+00 : f32
      %9 = vector.broadcast %cst_8 : f32 to vector<384x256xf32>
      %c0_9 = arith.constant 0 : index
      %c0_10 = arith.constant 0 : index
      %10 = vector.load %arg5[%c0_9, %c0_10] : memref<384x256xf32, #tpu.memory_space<vmem>>, vector<384x256xf32>
      tpu.vector_store %arg5[%c0_9, %c0_10], %9 {strides = array<i32>} : memref<384x256xf32, #tpu.memory_space<vmem>>, vector<384x256xf32>,
    } else {
    }
    %c0 = arith.constant 0 : index
    %c0_1 = arith.constant 0 : index
    %3 = vector.load %arg5[%c0, %c0_1] : memref<384x256xf32, #tpu.memory_space<vmem>>, vector<384x256xf32>
    %c0_2 = arith.constant 0 : index
    %c0_3 = arith.constant 0 : index
    %4 = vector.load %arg3[%c0_2, %c0_3] : memref<384x512xf32, #tpu.memory_space<vmem>>, vector<384x512xf32>
    %c0_4 = arith.constant 0 : index
    %c0_5 = arith.constant 0 : index
    %5 = vector.load %arg4[%c0_4, %c0_5] : memref<256x512xf32, #tpu.memory_space<vmem>>, vector<256x512xf32>
    %cst = arith.constant dense<0.000000e+00> : vector<384x256xf32>
    %6 = tpu.matmul %4, %5, %cst {dimension_numbers = #tpu.dot_dimension_numbers<[1], [1], [0], [0], [0, 0, 1, 0], [], []>} : vector<384x512xf32>, vector<256x512xf32>, vector<384x256xf32> -> vector<384x256xf32>
    %7 = arith.addf %3, %6 : vector<384x256xf32>
    %c0_6 = arith.constant 0 : index
    %c0_7 = arith.constant 0 : index
    %8 = vector.load %arg5[%c0_6, %c0_7] : memref<384x256xf32, #tpu.memory_space<vmem>>, vector<384x256xf32>
    tpu.vector_store %arg5[%c0_6, %c0_7], %7 {strides = array<i32>} : memref<384x256xf32, #tpu.memory_space<vmem>>, vector<384x256xf32>,
    return
  }
  func.func @transform_0(%arg0: i32, %arg1: i32, %arg2: i32) -> (i32, i32) {
    %c0_i32 = arith.constant 0 : i32
    return %arg0, %arg2 : i32, i32
  }
  func.func @transform_1(%arg0: i32, %arg1: i32, %arg2: i32) -> (i32, i32) {
    %c0_i32 = arith.constant 0 : i32
    return %arg1, %arg2 : i32, i32
  }
  func.func @transform_2(%arg0: i32, %arg1: i32, %arg2: i32) -> (i32, i32) {
    %c0_i32 = arith.constant 0 : i32
    return %arg0, %arg1 : i32, i32
  }
}

</mosaic_0001>

<llo_original>
// kernel: tpu_custom_call.1
$region0: #{tpu_custom_call.1}
  #allocation0 [shape = 'u32[]', space=smem, size = 0x4, offset = 0x4, fixed_abs, tag = 'smem constant byte address 0x4 - core index']
  #allocation1 [shape = 'u32[144,128]{1,0:T(1,128)}', space=vmem, size = 0x12000, scoped, tag = 'internal scratch']
  %s0 = inlined_call_operand.hbm [shape: f32[384,512], index: 0, kind: input, shape index: {}]
  %s1 = inlined_call_operand.hbm [shape: f32[256,512], index: 1, kind: input, shape index: {}]
  %s2 = inlined_call_operand.hbm [shape: f32[384,256], index: 2, kind: output, shape index: {}]
  %s3 = sld [smem:[#allocation0]]
  $region30: #{tpu_custom_call.1} parent=0
    _
  %s5 = ssub.s32 1, %s3
  %s6 = scalar_select 0, %s5, %s3
  $region1: #{tpu_custom_call.1} parent=0
    #allocation2 [shape = 'u8[786432]{0}', space=vmem, size = 0xc0000, scoped, tag = 'input window, operand 0, single buffered']
    #allocation3 [shape = 's32[1]{0}', space=sflag, size = 0x4, scoped, tag = 'scoped memory for tpu_custom_call.1']
    #allocation4 [shape = 's32[1]{0}', space=sflag, size = 0x4, scoped, tag = 'scoped memory for tpu_custom_call.1']
    #allocation5 [shape = 'u8[524288]{0}', space=vmem, size = 0x80000, scoped, tag = 'input window, operand 1, single buffered']
    #allocation6 [shape = 's32[1]{0}', space=sflag, size = 0x4, scoped, tag = 'scoped memory for tpu_custom_call.1']
    #allocation7 [shape = 'u8[393216]{0}', space=vmem, size = 0x60000, scoped, tag = 'output window, operand 0, single buffered']
    %7 = vsyncpa [#allocation3], 0
    %8 = vsyncpa [#allocation6], 0
    %9 = vsyncpa [#allocation4], 0
    // Predicated region
    $region2: #{tpu_custom_call.1} parent=1 // pred_check
      _
    $region3: #{tpu_custom_call.1} parent=1 // pred_check_branch
      %11 = sbr.rel (0) target = $region5
    $region4: #{tpu_custom_call.1} parent=1 // pred_region
      %s13 = ssub.s32 24576, 24576
      %14 = vsyncadd [#allocation3], %s13
      %s15 = sshll.u32 [#allocation2], 4
      %s16 = int_to_ptr.vmem [resolvable:$true] %s15
      %21 = dma.hbm_to_vmem [thread:$0]  %s0, 24576, %s16, [#allocation3], 512, 512, 32
    $region5: #{tpu_custom_call.1} parent=1 // pred_fallthru
      _
    // Predicated region
    $region6: #{tpu_custom_call.1} parent=1 // pred_check
      _
    $region7: #{tpu_custom_call.1} parent=1 // pred_check_branch
      %23 = sbr.rel (0) target = $region9
    $region8: #{tpu_custom_call.1} parent=1 // pred_region
      %s25 = ssub.s32 16384, 16384
      %26 = vsyncadd [#allocation6], %s25
      %s27 = sshll.u32 [#allocation5], 4
      %s28 = int_to_ptr.vmem [resolvable:$true] %s27
      %33 = dma.hbm_to_vmem [thread:$0]  %s1, 16384, %s28, [#allocation6], 512, 512, 32
    $region9: #{tpu_custom_call.1} parent=1 // pred_fallthru
      _
    // Predicated region
    $region10: #{tpu_custom_call.1} parent=1 // pred_check
      _
    $region11: #{tpu_custom_call.1} parent=1 // pred_check_branch
      %35 = sbr.rel (0) target = $region13
    $region12: #{tpu_custom_call.1} parent=1 // pred_region
      %36 = dma.done [#allocation3], 24576
    $region13: #{tpu_custom_call.1} parent=1 // pred_fallthru
      _
    // Predicated region
    $region14: #{tpu_custom_call.1} parent=1 // pred_check
      _
    $region15: #{tpu_custom_call.1} parent=1 // pred_check_branch
      %38 = sbr.rel (0) target = $region17
    $region16: #{tpu_custom_call.1} parent=1 // pred_region
      %39 = dma.done [#allocation6], 16384
    $region17: #{tpu_custom_call.1} parent=1 // pred_fallthru
      _
    %p40 = scmp.eq.s32.totalorder 0, 0
    // Predicated region
    $region18: #{tpu_custom_call.1} parent=1 // pred_check
      %p41 = pneg %p40
    $region19: #{tpu_custom_call.1} parent=1 // pred_check_branch
      %43 = sbr.rel (%p41) target = $region21
    $region20: #{tpu_custom_call.1} parent=1 // pred_region
      %44 = vst [vmem:[#allocation7] sm:$0xff] 0.0
      %45 = vst [vmem:[#allocation7 + $0x8] sm:$0xff] 0.0
      %46 = vst [vmem:[#allocation7 + $0x10] sm:$0xff] 0.0
      %47 = vst [vmem:[#allocation7 + $0x18] sm:$0xff] 0.0
      %48 = vst [vmem:[#allocation7 + $0x20] sm:$0xff] 0.0
      %49 = vst [vmem:[#allocation7 + $0x28] sm:$0xff] 0.0
      %50 = vst [vmem:[#allocation7 + $0x30] sm:$0xff] 0.0
      %51 = vst [vmem:[#allocation7 + $0x38] sm:$0xff] 0.0
      %52 = vst [vmem:[#allocation7 + $0x40] sm:$0xff] 0.0
      %53 = vst [vmem:[#allocation7 + $0x48] sm:$0xff] 0.0
      %54 = vst [vmem:[#allocation7 + $0x50] sm:$0xff] 0.0
      %55 = vst [vmem:[#allocation7 + $0x58] sm:$0xff] 0.0
      %56 = vst [vmem:[#allocation7 + $0x60] sm:$0xff] 0.0
      %57 = vst [vmem:[#allocation7 + $0x68] sm:$0xff] 0.0
      %58 = vst [vmem:[#allocation7 + $0x70] sm:$0xff] 0.0
      %59 = vst [vmem:[#allocation7 + $0x78] sm:$0xff] 0.0
      %60 = vst [vmem:[#allocation7 + $0x80] sm:$0xff] 0.0
      %61 = vst [vmem:[#allocation7 + $0x88] sm:$0xff] 0.0
      %62 = vst [vmem:[#allocation7 + $0x90] sm:$0xff] 0.0
      %63 = vst [vmem:[#allocation7 + $0x98] sm:$0xff] 0.0
      %64 = vst [vmem:[#allocation7 + $0xa0] sm:$0xff] 0.0
      %65 = vst [vmem:[#allocation7 + $0xa8] sm:$0xff] 0.0
      %66 = vst [vmem:[#allocation7 + $0xb0] sm:$0xff] 0.0
      %67 = vst [vmem:[#allocation7 + $0xb8] sm:$0xff] 0.0
      %68 = vst [vmem:[#allocation7 + $0xc0] sm:$0xff] 0.0
      %69 = vst [vmem:[#allocation7 + $0xc8] sm:$0xff] 0.0
      %70 = vst [vmem:[#allocation7 + $0xd0] sm:$0xff] 0.0
      %71 = vst [vmem:[#allocation7 + $0xd8] sm:$0xff] 0.0
      %72 = vst [vmem:[#allocation7 + $0xe0] sm:$0xff] 0.0
      %73 = vst [vmem:[#allocation7 + $0xe8] sm:$0xff] 0.0
      %74 = vst [vmem:[#allocation7 + $0xf0] sm:$0xff] 0.0
      %75 = vst [vmem:[#allocation7 + $0xf8] sm:$0xff] 0.0
      %76 = vst [vmem:[#allocation7 + $0x100] sm:$0xff] 0.0
      %77 = vst [vmem:[#allocation7 + $0x108] sm:$0xff] 0.0
      %78 = vst [vmem:[#allocation7 + $0x110] sm:$0xff] 0.0
      %79 = vst [vmem:[#allocation7 + $0x118] sm:$0xff] 0.0
      %80 = vst [vmem:[#allocation7 + $0x120] sm:$0xff] 0.0
      %81 = vst [vmem:[#allocation7 + $0x128] sm:$0xff] 0.0
      %82 = vst [vmem:[#allocation7 + $0x130] sm:$0xff] 0.0
      %83 = vst [vmem:[#allocation7 + $0x138] sm:$0xff] 0.0
      %84 = vst [vmem:[#allocation7 + $0x140] sm:$0xff] 0.0
      %85 = vst [vmem:[#allocation7 + $0x148] sm:$0xff] 0.0
      %86 = vst [vmem:[#allocation7 + $0x150] sm:$0xff] 0.0
      %87 = vst [vmem:[#allocation7 + $0x158] sm:$0xff] 0.0
      %88 = vst [vmem:[#allocation7 + $0x160] sm:$0xff] 0.0
      %89 = vst [vmem:[#allocation7 + $0x168] sm:$0xff] 0.0
      %90 = vst [vmem:[#allocation7 + $0x170] sm:$0xff] 0.0
      %91 = vst [vmem:[#allocation7 + $0x178] sm:$0xff] 0.0
      %92 = vst [vmem:[#allocation7 + $0x180] sm:$0xff] 0.0
      %93 = vst [vmem:[#allocation7 + $0x188] sm:$0xff] 0.0
      %94 = vst [vmem:[#allocation7 + $0x190] sm:$0xff] 0.0
      %95 = vst [vmem:[#allocation7 + $0x198] sm:$0xff] 0.0
      %96 = vst [vmem:[#allocation7 + $0x1a0] sm:$0xff] 0.0
      %97 = vst [vmem:[#allocation7 + $0x1a8] sm:$0xff] 0.0
      %98 = vst [vmem:[#allocation7 + $0x1b0] sm:$0xff] 0.0
      %99 = vst [vmem:[#allocation7 + $0x1b8] sm:$0xff] 0.0
      %100 = vst [vmem:[#allocation7 + $0x1c0] sm:$0xff] 0.0
      %101 = vst [vmem:[#allocation7 + $0x1c8] sm:$0xff] 0.0
      %102 = vst [vmem:[#allocation7 + $0x1d0] sm:$0xff] 0.0
      %103 = vst [vmem:[#allocation7 + $0x1d8] sm:$0xff] 0.0
      %104 = vst [vmem:[#allocation7 + $0x1e0] sm:$0xff] 0.0
      %105 = vst [vmem:[#allocation7 + $0x1e8] sm:$0xff] 0.0
      %106 = vst [vmem:[#allocation7 + $0x1f0] sm:$0xff] 0.0
      %107 = vst [vmem:[#allocation7 + $0x1f8] sm:$0xff] 0.0
      %108 = vst [vmem:[#allocation7 + $0x200] sm:$0xff] 0.0
      %109 = vst [vmem:[#allocation7 + $0x208] sm:$0xff] 0.0
      %110 = vst [vmem:[#allocation7 + $0x210] sm:$0xff] 0.0
      %111 = vst [vmem:[#allocation7 + $0x218] sm:$0xff] 0.0
      %112 = vst [vmem:[#allocation7 + $0x220] sm:$0xff] 0.0
      %113 = vst [vmem:[#allocation7 + $0x228] sm:$0xff] 0.0
      %114 = vst [vmem:[#allocation7 + $0x230] sm:$0xff] 0.0
      %115 = vst [vmem:[#allocation7 + $0x238] sm:$0xff] 0.0
      %116 = vst [vmem:[#allocation7 + $0x240] sm:$0xff] 0.0
      %117 = vst [vmem:[#allocation7 + $0x248] sm:$0xff] 0.0
      %118 = vst [vmem:[#allocation7 + $0x250] sm:$0xff] 0.0
      %119 = vst [vmem:[#allocation7 + $0x258] sm:$0xff] 0.0
      %120 = vst [vmem:[#allocation7 + $0x260] sm:$0xff] 0.0
      %121 = vst [vmem:[#allocation7 + $0x268] sm:$0xff] 0.0
      %122 = vst [vmem:[#allocation7 + $0x270] sm:$0xff] 0.0
      %123 = vst [vmem:[#allocation7 + $0x278] sm:$0xff] 0.0
      %124 = vst [vmem:[#allocation7 + $0x280] sm:$0xff] 0.0
      %125 = vst [vmem:[#allocation7 + $0x288] sm:$0xff] 0.0
      %126 = vst [vmem:[#allocation7 + $0x290] sm:$0xff] 0.0
      %127 = vst [vmem:[#allocation7 + $0x298] sm:$0xff] 0.0
      %128 = vst [vmem:[#allocation7 + $0x2a0] sm:$0xff] 0.0
      %129 = vst [vmem:[#allocation7 + $0x2a8] sm:$0xff] 0.0
      %130 = vst [vmem:[#allocation7 + $0x2b0] sm:$0xff] 0.0
      %131 = vst [vmem:[#allocation7 + $0x2b8] sm:$0xff] 0.0
      %132 = vst [vmem:[#allocation7 + $0x2c0] sm:$0xff] 0.0
      %133 = vst [vmem:[#allocation7 + $0x2c8] sm:$0xff] 0.0
      %134 = vst [vmem:[#allocation7 + $0x2d0] sm:$0xff] 0.0
      %135 = vst [vmem:[#allocation7 + $0x2d8] sm:$0xff] 0.0
      %136 = vst [vmem:[#allocation7 + $0x2e0] sm:$0xff] 0.0
      %137 = vst [vmem:[#allocation7 + $0x2e8] sm:$0xff] 0.0
      %138 = vst [vmem:[#allocation7 + $0x2f0] sm:$0xff] 0.0
      %139 = vst [vmem:[#allocation7 + $0x2f8] sm:$0xff] 0.0
    $region21: #{tpu_custom_call.1} parent=1 // pred_fallthru
      _
    %v140 = vld [vmem:[#allocation7] sm:$0xff]
    %v141 = vld [vmem:[#allocation7 + $0x8] sm:$0xff]
    %v142 = vld [vmem:[#allocation7 + $0x10] sm:$0xff]
    %v143 = vld [vmem:[#allocation7 + $0x18] sm:$0xff]
    %v144 = vld [vmem:[#allocation7 + $0x20] sm:$0xff]
    %v145 = vld [vmem:[#allocation7 + $0x28] sm:$0xff]
    %v146 = vld [vmem:[#allocation7 + $0x30] sm:$0xff]
    %v147 = vld [vmem:[#allocation7 + $0x38] sm:$0xff]
    %v148 = vld [vmem:[#allocation7 + $0x40] sm:$0xff]
    %v149 = vld [vmem:[#allocation7 + $0x48] sm:$0xff]
    %v150 = vld [vmem:[#allocation7 + $0x50] sm:$0xff]
    %v151 = vld [vmem:[#allocation7 + $0x58] sm:$0xff]
    %v152 = vld [vmem:[#allocation7 + $0x60] sm:$0xff]
    %v153 = vld [vmem:[#allocation7 + $0x68] sm:$0xff]
    %v154 = vld [vmem:[#allocation7 + $0x70] sm:$0xff]
    %v155 = vld [vmem:[#allocation7 + $0x78] sm:$0xff]
    %v156 = vld [vmem:[#allocation7 + $0x80] sm:$0xff]
    %v157 = vld [vmem:[#allocation7 + $0x88] sm:$0xff]
    %v158 = vld [vmem:[#allocation7 + $0x90] sm:$0xff]
    %v159 = vld [vmem:[#allocation7 + $0x98] sm:$0xff]
    %v160 = vld [vmem:[#allocation7 + $0xa0] sm:$0xff]
    %v161 = vld [vmem:[#allocation7 + $0xa8] sm:$0xff]
    %v162 = vld [vmem:[#allocation7 + $0xb0] sm:$0xff]
    %v163 = vld [vmem:[#allocation7 + $0xb8] sm:$0xff]
    %v164 = vld [vmem:[#allocation7 + $0xc0] sm:$0xff]
    %v165 = vld [vmem:[#allocation7 + $0xc8] sm:$0xff]
    %v166 = vld [vmem:[#allocation7 + $0xd0] sm:$0xff]
    %v167 = vld [vmem:[#allocation7 + $0xd8] sm:$0xff]
    %v168 = vld [vmem:[#allocation7 + $0xe0] sm:$0xff]
    %v169 = vld [vmem:[#allocation7 + $0xe8] sm:$0xff]
    %v170 = vld [vmem:[#allocation7 + $0xf0] sm:$0xff]
    %v171 = vld [vmem:[#allocation7 + $0xf8] sm:$0xff]
    %v172 = vld [vmem:[#allocation7 + $0x100] sm:$0xff]
    %v173 = vld [vmem:[#allocation7 + $0x108] sm:$0xff]
    %v174 = vld [vmem:[#allocation7 + $0x110] sm:$0xff]
    %v175 = vld [vmem:[#allocation7 + $0x118] sm:$0xff]
    %v176 = vld [vmem:[#allocation7 + $0x120] sm:$0xff]
    %v177 = vld [vmem:[#allocation7 + $0x128] sm:$0xff]
    %v178 = vld [vmem:[#allocation7 + $0x130] sm:$0xff]
    %v179 = vld [vmem:[#allocation7 + $0x138] sm:$0xff]
    %v180 = vld [vmem:[#allocation7 + $0x140] sm:$0xff]
    %v181 = vld [vmem:[#allocation7 + $0x148] sm:$0xff]
    %v182 = vld [vmem:[#allocation7 + $0x150] sm:$0xff]
    %v183 = vld [vmem:[#allocation7 + $0x158] sm:$0xff]
    %v184 = vld [vmem:[#allocation7 + $0x160] sm:$0xff]
    %v185 = vld [vmem:[#allocation7 + $0x168] sm:$0xff]
    %v186 = vld [vmem:[#allocation7 + $0x170] sm:$0xff]
    %v187 = vld [vmem:[#allocation7 + $0x178] sm:$0xff]
    %v188 = vld [vmem:[#allocation7 + $0x180] sm:$0xff]
    %v189 = vld [vmem:[#allocation7 + $0x188] sm:$0xff]
    %v190 = vld [vmem:[#allocation7 + $0x190] sm:$0xff]
    %v191 = vld [vmem:[#allocation7 + $0x198] sm:$0xff]
    %v192 = vld [vmem:[#allocation7 + $0x1a0] sm:$0xff]
    %v193 = vld [vmem:[#allocation7 + $0x1a8] sm:$0xff]
    %v194 = vld [vmem:[#allocation7 + $0x1b0] sm:$0xff]
    %v195 = vld [vmem:[#allocation7 + $0x1b8] sm:$0xff]
    %v196 = vld [vmem:[#allocation7 + $0x1c0] sm:$0xff]
    %v197 = vld [vmem:[#allocation7 + $0x1c8] sm:$0xff]
    %v198 = vld [vmem:[#allocation7 + $0x1d0] sm:$0xff]
    %v199 = vld [vmem:[#allocation7 + $0x1d8] sm:$0xff]
    %v200 = vld [vmem:[#allocation7 + $0x1e0] sm:$0xff]
    %v201 = vld [vmem:[#allocation7 + $0x1e8] sm:$0xff]
    %v202 = vld [vmem:[#allocation7 + $0x1f0] sm:$0xff]
    %v203 = vld [vmem:[#allocation7 + $0x1f8] sm:$0xff]
    %v204 = vld [vmem:[#allocation7 + $0x200] sm:$0xff]
    %v205 = vld [vmem:[#allocation7 + $0x208] sm:$0xff]
    %v206 = vld [vmem:[#allocation7 + $0x210] sm:$0xff]
    %v207 = vld [vmem:[#allocation7 + $0x218] sm:$0xff]
    %v208 = vld [vmem:[#allocation7 + $0x220] sm:$0xff]
    %v209 = vld [vmem:[#allocation7 + $0x228] sm:$0xff]
    %v210 = vld [vmem:[#allocation7 + $0x230] sm:$0xff]
    %v211 = vld [vmem:[#allocation7 + $0x238] sm:$0xff]
    %v212 = vld [vmem:[#allocation7 + $0x240] sm:$0xff]
    %v213 = vld [vmem:[#allocation7 + $0x248] sm:$0xff]
    %v214 = vld [vmem:[#allocation7 + $0x250] sm:$0xff]
    %v215 = vld [vmem:[#allocation7 + $0x258] sm:$0xff]
    %v216 = vld [vmem:[#allocation7 + $0x260] sm:$0xff]
    %v217 = vld [vmem:[#allocation7 + $0x268] sm:$0xff]
    %v218 = vld [vmem:[#allocation7 + $0x270] sm:$0xff]
    %v219 = vld [vmem:[#allocation7 + $0x278] sm:$0xff]
    %v220 = vld [vmem:[#allocation7 + $0x280] sm:$0xff]
    %v221 = vld [vmem:[#allocation7 + $0x288] sm:$0xff]
    %v222 = vld [vmem:[#allocation7 + $0x290] sm:$0xff]
    %v223 = vld [vmem:[#allocation7 + $0x298] sm:$0xff]
    %v224 = vld [vmem:[#allocation7 + $0x2a0] sm:$0xff]
    %v225 = vld [vmem:[#allocation7 + $0x2a8] sm:$0xff]
    %v226 = vld [vmem:[#allocation7 + $0x2b0] sm:$0xff]
    %v227 = vld [vmem:[#allocation7 + $0x2b8] sm:$0xff]
    %v228 = vld [vmem:[#allocation7 + $0x2c0] sm:$0xff]
    %v229 = vld [vmem:[#allocation7 + $0x2c8] sm:$0xff]
    %v230 = vld [vmem:[#allocation7 + $0x2d0] sm:$0xff]
    %v231 = vld [vmem:[#allocation7 + $0x2d8] sm:$0xff]
    %v232 = vld [vmem:[#allocation7 + $0x2e0] sm:$0xff]
    %v233 = vld [vmem:[#allocation7 + $0x2e8] sm:$0xff]
    %v234 = vld [vmem:[#allocation7 + $0x2f0] sm:$0xff]
    %v235 = vld [vmem:[#allocation7 + $0x2f8] sm:$0xff]
    %v236 = vld [vmem:[#allocation2] sm:$0xff]
    %v237 = vld [vmem:[#allocation2 + $0x8] sm:$0xff]
    %v238 = vld [vmem:[#allocation2 + $0x10] sm:$0xff]
    %v239 = vld [vmem:[#allocation2 + $0x18] sm:$0xff]
    %v240 = vld [vmem:[#allocation2 + $0x20] sm:$0xff]
    %v241 = vld [vmem:[#allocation2 + $0x28] sm:$0xff]
    %v242 = vld [vmem:[#allocation2 + $0x30] sm:$0xff]
    %v243 = vld [vmem:[#allocation2 + $0x38] sm:$0xff]
    %v244 = vld [vmem:[#allocation2 + $0x40] sm:$0xff]
    %v245 = vld [vmem:[#allocation2 + $0x48] sm:$0xff]
    %v246 = vld [vmem:[#allocation2 + $0x50] sm:$0xff]
    %v247 = vld [vmem:[#allocation2 + $0x58] sm:$0xff]
    %v248 = vld [vmem:[#allocation2 + $0x60] sm:$0xff]
    %v249 = vld [vmem:[#allocation2 + $0x68] sm:$0xff]
    %v250 = vld [vmem:[#allocation2 + $0x70] sm:$0xff]
    %v251 = vld [vmem:[#allocation2 + $0x78] sm:$0xff]
    %v252 = vld [vmem:[#allocation2 + $0x80] sm:$0xff]
    %v253 = vld [vmem:[#allocation2 + $0x88] sm:$0xff]
    %v254 = vld [vmem:[#allocation2 + $0x90] sm:$0xff]
    %v255 = vld [vmem:[#allocation2 + $0x98] sm:$0xff]
    %v256 = vld [vmem:[#allocation2 + $0xa0] sm:$0xff]
    %v257 = vld [vmem:[#allocation2 + $0xa8] sm:$0xff]
    %v258 = vld [vmem:[#allocation2 + $0xb0] sm:$0xff]
    %v259 = vld [vmem:[#allocation2 + $0xb8] sm:$0xff]
    %v260 = vld [vmem:[#allocation2 + $0xc0] sm:$0xff]
    %v261 = vld [vmem:[#allocation2 + $0xc8] sm:$0xff]
    %v262 = vld [vmem:[#allocation2 + $0xd0] sm:$0xff]
    %v263 = vld [vmem:[#allocation2 + $0xd8] sm:$0xff]
    %v264 = vld [vmem:[#allocation2 + $0xe0] sm:$0xff]
    %v265 = vld [vmem:[#allocation2 + $0xe8] sm:$0xff]
    %v266 = vld [vmem:[#allocation2 + $0xf0] sm:$0xff]
    %v267 = vld [vmem:[#allocation2 + $0xf8] sm:$0xff]
    %v268 = vld [vmem:[#allocation2 + $0x100] sm:$0xff]
    %v269 = vld [vmem:[#allocation2 + $0x108] sm:$0xff]
    %v270 = vld [vmem:[#allocation2 + $0x110] sm:$0xff]
    %v271 = vld [vmem:[#allocation2 + $0x118] sm:$0xff]
    %v272 = vld [vmem:[#allocation2 + $0x120] sm:$0xff]
    %v273 = vld [vmem:[#allocation2 + $0x128] sm:$0xff]
    %v274 = vld [vmem:[#allocation2 + $0x130] sm:$0xff]
    %v275 = vld [vmem:[#allocation2 + $0x138] sm:$0xff]
    %v276 = vld [vmem:[#allocation2 + $0x140] sm:$0xff]
    %v277 = vld [vmem:[#allocation2 + $0x148] sm:$0xff]
    %v278 = vld [vmem:[#allocation2 + $0x150] sm:$0xff]
    %v279 = vld [vmem:[#allocation2 + $0x158] sm:$0xff]
    %v280 = vld [vmem:[#allocation2 + $0x160] sm:$0xff]
    %v281 = vld [vmem:[#allocation2 + $0x168] sm:$0xff]
    %v282 = vld [vmem:[#allocation2 + $0x170] sm:$0xff]
    %v283 = vld [vmem:[#allocation2 + $0x178] sm:$0xff]
    %v284 = vld [vmem:[#allocation2 + $0x180] sm:$0xff]
    %v285 = vld [vmem:[#allocation2 + $0x188] sm:$0xff]
    %v286 = vld [vmem:[#allocation2 + $0x190] sm:$0xff]
    %v287 = vld [vmem:[#allocation2 + $0x198] sm:$0xff]
    %v288 = vld [vmem:[#allocation2 + $0x1a0] sm:$0xff]
    %v289 = vld [vmem:[#allocation2 + $0x1a8] sm:$0xff]
    %v290 = vld [vmem:[#allocation2 + $0x1b0] sm:$0xff]
    %v291 = vld [vmem:[#allocation2 + $0x1b8] sm:$0xff]
    %v292 = vld [vmem:[#allocation2 + $0x1c0] sm:$0xff]
    %v293 = vld [vmem:[#allocation2 + $0x1c8] sm:$0xff]
    %v294 = vld [vmem:[#allocation2 + $0x1d0] sm:$0xff]
    %v295 = vld [vmem:[#allocation2 + $0x1d8] sm:$0xff]
    %v296 = vld [vmem:[#allocation2 + $0x1e0] sm:$0xff]
    %v297 = vld [vmem:[#allocation2 + $0x1e8] sm:$0xff]
    %v298 = vld [vmem:[#allocation2 + $0x1f0] sm:$0xff]
    %v299 = vld [vmem:[#allocation2 + $0x1f8] sm:$0xff]
    %v300 = vld [vmem:[#allocation2 + $0x200] sm:$0xff]
    %v301 = vld [vmem:[#allocation2 + $0x208] sm:$0xff]
    %v302 = vld [vmem:[#allocation2 + $0x210] sm:$0xff]
    %v303 = vld [vmem:[#allocation2 + $0x218] sm:$0xff]
    %v304 = vld [vmem:[#allocation2 + $0x220] sm:$0xff]
    %v305 = vld [vmem:[#allocation2 + $0x228] sm:$0xff]
    %v306 = vld [vmem:[#allocation2 + $0x230] sm:$0xff]
    %v307 = vld [vmem:[#allocation2 + $0x238] sm:$0xff]
    %v308 = vld [vmem:[#allocation2 + $0x240] sm:$0xff]
    %v309 = vld [vmem:[#allocation2 + $0x248] sm:$0xff]
    %v310 = vld [vmem:[#allocation2 + $0x250] sm:$0xff]
    %v311 = vld [vmem:[#allocation2 + $0x258] sm:$0xff]
    %v312 = vld [vmem:[#allocation2 + $0x260] sm:$0xff]
    %v313 = vld [vmem:[#allocation2 + $0x268] sm:$0xff]
    %v314 = vld [vmem:[#allocation2 + $0x270] sm:$0xff]
    %v315 = vld [vmem:[#allocation2 + $0x278] sm:$0xff]
    %v316 = vld [vmem:[#allocation2 + $0x280] sm:$0xff]
    %v317 = vld [vmem:[#allocation2 + $0x288] sm:$0xff]
    %v318 = vld [vmem:[#allocation2 + $0x290] sm:$0xff]
    %v319 = vld [vmem:[#allocation2 + $0x298] sm:$0xff]
    %v320 = vld [vmem:[#allocation2 + $0x2a0] sm:$0xff]
    %v321 = vld [vmem:[#allocation2 + $0x2a8] sm:$0xff]
    %v322 = vld [vmem:[#allocation2 + $0x2b0] sm:$0xff]
    %v323 = vld [vmem:[#allocation2 + $0x2b8] sm:$0xff]
    %v324 = vld [vmem:[#allocation2 + $0x2c0] sm:$0xff]
    %v325 = vld [vmem:[#allocation2 + $0x2c8] sm:$0xff]
    %v326 = vld [vmem:[#allocation2 + $0x2d0] sm:$0xff]
    %v327 = vld [vmem:[#allocation2 + $0x2d8] sm:$0xff]
    %v328 = vld [vmem:[#allocation2 + $0x2e0] sm:$0xff]
    %v329 = vld [vmem:[#allocation2 + $0x2e8] sm:$0xff]
    %v330 = vld [vmem:[#allocation2 + $0x2f0] sm:$0xff]
    %v331 = vld [vmem:[#allocation2 + $0x2f8] sm:$0xff]
    %v332 = vld [vmem:[#allocation2 + $0x300] sm:$0xff]
    %v333 = vld [vmem:[#allocation2 + $0x308] sm:$0xff]
    %v334 = vld [vmem:[#allocation2 + $0x310] sm:$0xff]
    %v335 = vld [vmem:[#allocation2 + $0x318] sm:$0xff]
    %v336 = vld [vmem:[#allocation2 + $0x320] sm:$0xff]
    %v337 = vld [vmem:[#allocation2 + $0x328] sm:$0xff]
    %v338 = vld [vmem:[#allocation2 + $0x330] sm:$0xff]
    %v339 = vld [vmem:[#allocation2 + $0x338] sm:$0xff]
    %v340 = vld [vmem:[#allocation2 + $0x340] sm:$0xff]
    %v341 = vld [vmem:[#allocation2 + $0x348] sm:$0xff]
    %v342 = vld [vmem:[#allocation2 + $0x350] sm:$0xff]
    %v343 = vld [vmem:[#allocation2 + $0x358] sm:$0xff]
    %v344 = vld [vmem:[#allocation2 + $0x360] sm:$0xff]
    %v345 = vld [vmem:[#allocation2 + $0x368] sm:$0xff]
    %v346 = vld [vmem:[#allocation2 + $0x370] sm:$0xff]
    %v347 = vld [vmem:[#allocation2 + $0x378] sm:$0xff]
    %v348 = vld [vmem:[#allocation2 + $0x380] sm:$0xff]
    %v349 = vld [vmem:[#allocation2 + $0x388] sm:$0xff]
    %v350 = vld [vmem:[#allocation2 + $0x390] sm:$0xff]
    %v351 = vld [vmem:[#allocation2 + $0x398] sm:$0xff]
    %v352 = vld [vmem:[#allocation2 + $0x3a0] sm:$0xff]
    %v353 = vld [vmem:[#allocation2 + $0x3a8] sm:$0xff]
    %v354 = vld [vmem:[#allocation2 + $0x3b0] sm:$0xff]
    %v355 = vld [vmem:[#allocation2 + $0x3b8] sm:$0xff]
    %v356 = vld [vmem:[#allocation2 + $0x3c0] sm:$0xff]
    %v357 = vld [vmem:[#allocation2 + $0x3c8] sm:$0xff]
    %v358 = vld [vmem:[#allocation2 + $0x3d0] sm:$0xff]
    %v359 = vld [vmem:[#allocation2 + $0x3d8] sm:$0xff]
    %v360 = vld [vmem:[#allocation2 + $0x3e0] sm:$0xff]
    %v361 = vld [vmem:[#allocation2 + $0x3e8] sm:$0xff]
    %v362 = vld [vmem:[#allocation2 + $0x3f0] sm:$0xff]
    %v363 = vld [vmem:[#allocation2 + $0x3f8] sm:$0xff]
    %v364 = vld [vmem:[#allocation2 + $0x400] sm:$0xff]
    %v365 = vld [vmem:[#allocation2 + $0x408] sm:$0xff]
    %v366 = vld [vmem:[#allocation2 + $0x410] sm:$0xff]
    %v367 = vld [vmem:[#allocation2 + $0x418] sm:$0xff]
    %v368 = vld [vmem:[#allocation2 + $0x420] sm:$0xff]
    %v369 = vld [vmem:[#allocation2 + $0x428] sm:$0xff]
    %v370 = vld [vmem:[#allocation2 + $0x430] sm:$0xff]
    %v371 = vld [vmem:[#allocation2 + $0x438] sm:$0xff]
    %v372 = vld [vmem:[#allocation2 + $0x440] sm:$0xff]
    %v373 = vld [vmem:[#allocation2 + $0x448] sm:$0xff]
    %v374 = vld [vmem:[#allocation2 + $0x450] sm:$0xff]
    %v375 = vld [vmem:[#allocation2 + $0x458] sm:$0xff]
    %v376 = vld [vmem:[#allocation2 + $0x460] sm:$0xff]
    %v377 = vld [vmem:[#allocation2 + $0x468] sm:$0xff]
    %v378 = vld [vmem:[#allocation2 + $0x470] sm:$0xff]
    %v379 = vld [vmem:[#allocation2 + $0x478] sm:$0xff]
    %v380 = vld [vmem:[#allocation2 + $0x480] sm:$0xff]
    %v381 = vld [vmem:[#allocation2 + $0x488] sm:$0xff]
    %v382 = vld [vmem:[#allocation2 + $0x490] sm:$0xff]
    %v383 = vld [vmem:[#allocation2 + $0x498] sm:$0xff]
    %v384 = vld [vmem:[#allocation2 + $0x4a0] sm:$0xff]
    %v385 = vld [vmem:[#allocation2 + $0x4a8] sm:$0xff]
    %v386 = vld [vmem:[#allocation2 + $0x4b0] sm:$0xff]
    %v387 = vld [vmem:[#allocation2 + $0x4b8] sm:$0xff]
    %v388 = vld [vmem:[#allocation2 + $0x4c0] sm:$0xff]
    %v389 = vld [vmem:[#allocation2 + $0x4c8] sm:$0xff]
    %v390 = vld [vmem:[#allocation2 + $0x4d0] sm:$0xff]
    %v391 = vld [vmem:[#allocation2 + $0x4d8] sm:$0xff]
    %v392 = vld [vmem:[#allocation2 + $0x4e0] sm:$0xff]
    %v393 = vld [vmem:[#allocation2 + $0x4e8] sm:$0xff]
    %v394 = vld [vmem:[#allocation2 + $0x4f0] sm:$0xff]
    %v395 = vld [vmem:[#allocation2 + $0x4f8] sm:$0xff]
    %v396 = vld [vmem:[#allocation2 + $0x500] sm:$0xff]
    %v397 = vld [vmem:[#allocation2 + $0x508] sm:$0xff]
    %v398 = vld [vmem:[#allocation2 + $0x510] sm:$0xff]
    %v399 = vld [vmem:[#allocation2 + $0x518] sm:$0xff]
    %v400 = vld [vmem:[#allocation2 + $0x520] sm:$0xff]
    %v401 = vld [vmem:[#allocation2 + $0x528] sm:$0xff]
    %v402 = vld [vmem:[#allocation2 + $0x530] sm:$0xff]
    %v403 = vld [vmem:[#allocation2 + $0x538] sm:$0xff]
    %v404 = vld [vmem:[#allocation2 + $0x540] sm:$0xff]
    %v405 = vld [vmem:[#allocation2 + $0x548] sm:$0xff]
    %v406 = vld [vmem:[#allocation2 + $0x550] sm:$0xff]
    %v407 = vld [vmem:[#allocation2 + $0x558] sm:$0xff]
    %v408 = vld [vmem:[#allocation2 + $0x560] sm:$0xff]
    %v409 = vld [vmem:[#allocation2 + $0x568] sm:$0xff]
    %v410 = vld [vmem:[#allocation2 + $0x570] sm:$0xff]
    %v411 = vld [vmem:[#allocation2 + $0x578] sm:$0xff]
    %v412 = vld [vmem:[#allocation2 + $0x580] sm:$0xff]
    %v413 = vld [vmem:[#allocation2 + $0x588] sm:$0xff]
    %v414 = vld [vmem:[#allocation2 + $0x590] sm:$0xff]
    %v415 = vld [vmem:[#allocation2 + $0x598] sm:$0xff]
    %v416 = vld [vmem:[#allocation2 + $0x5a0] sm:$0xff]
    %v417 = vld [vmem:[#allocation2 + $0x5a8] sm:$0xff]
    %v418 = vld [vmem:[#allocation2 + $0x5b0] sm:$0xff]
    %v419 = vld [vmem:[#allocation2 + $0x5b8] sm:$0xff]
    %v420 = vld [vmem:[#allocation2 + $0x5c0] sm:$0xff]
    %v421 = vld [vmem:[#allocation2 + $0x5c8] sm:$0xff]
    %v422 = vld [vmem:[#allocation2 + $0x5d0] sm:$0xff]
    %v423 = vld [vmem:[#allocation2 + $0x5d8] sm:$0xff]
    %v424 = vld [vmem:[#allocation2 + $0x5e0] sm:$0xff]
    %v425 = vld [vmem:[#allocation2 + $0x5e8] sm:$0xff]
    %v426 = vld [vmem:[#allocation2 + $0x5f0] sm:$0xff]
    %v427 = vld [vmem:[#allocation2 + $0x5f8] sm:$0xff]
    %v428 = vld [vmem:[#allocation5] sm:$0xff]
    %v429 = vld [vmem:[#allocation5 + $0x8] sm:$0xff]
    %v430 = vld [vmem:[#allocation5 + $0x10] sm:$0xff]
    %v431 = vld [vmem:[#allocation5 + $0x18] sm:$0xff]
    %v432 = vld [vmem:[#allocation5 + $0x20] sm:$0xff]
    %v433 = vld [vmem:[#allocation5 + $0x28] sm:$0xff]
    %v434 = vld [vmem:[#allocation5 + $0x30] sm:$0xff]
    %v435 = vld [vmem:[#allocation5 + $0x38] sm:$0xff]
    %v436 = vld [vmem:[#allocation5 + $0x40] sm:$0xff]
    %v437 = vld [vmem:[#allocation5 + $0x48] sm:$0xff]
    %v438 = vld [vmem:[#allocation5 + $0x50] sm:$0xff]
    %v439 = vld [vmem:[#allocation5 + $0x58] sm:$0xff]
    %v440 = vld [vmem:[#allocation5 + $0x60] sm:$0xff]
    %v441 = vld [vmem:[#allocation5 + $0x68] sm:$0xff]
    %v442 = vld [vmem:[#allocation5 + $0x70] sm:$0xff]
    %v443 = vld [vmem:[#allocation5 + $0x78] sm:$0xff]
    %v444 = vld [vmem:[#allocation5 + $0x80] sm:$0xff]
    %v445 = vld [vmem:[#allocation5 + $0x88] sm:$0xff]
    %v446 = vld [vmem:[#allocation5 + $0x90] sm:$0xff]
    %v447 = vld [vmem:[#allocation5 + $0x98] sm:$0xff]
    %v448 = vld [vmem:[#allocation5 + $0xa0] sm:$0xff]
    %v449 = vld [vmem:[#allocation5 + $0xa8] sm:$0xff]
    %v450 = vld [vmem:[#allocation5 + $0xb0] sm:$0xff]
    %v451 = vld [vmem:[#allocation5 + $0xb8] sm:$0xff]
    %v452 = vld [vmem:[#allocation5 + $0xc0] sm:$0xff]
    %v453 = vld [vmem:[#allocation5 + $0xc8] sm:$0xff]
    %v454 = vld [vmem:[#allocation5 + $0xd0] sm:$0xff]
    %v455 = vld [vmem:[#allocation5 + $0xd8] sm:$0xff]
    %v456 = vld [vmem:[#allocation5 + $0xe0] sm:$0xff]
    %v457 = vld [vmem:[#allocation5 + $0xe8] sm:$0xff]
    %v458 = vld [vmem:[#allocation5 + $0xf0] sm:$0xff]
    %v459 = vld [vmem:[#allocation5 + $0xf8] sm:$0xff]
    %v460 = vld [vmem:[#allocation5 + $0x100] sm:$0xff]
    %v461 = vld [vmem:[#allocation5 + $0x108] sm:$0xff]
    %v462 = vld [vmem:[#allocation5 + $0x110] sm:$0xff]
    %v463 = vld [vmem:[#allocation5 + $0x118] sm:$0xff]
    %v464 = vld [vmem:[#allocation5 + $0x120] sm:$0xff]
    %v465 = vld [vmem:[#allocation5 + $0x128] sm:$0xff]
    %v466 = vld [vmem:[#allocation5 + $0x130] sm:$0xff]
    %v467 = vld [vmem:[#allocation5 + $0x138] sm:$0xff]
    %v468 = vld [vmem:[#allocation5 + $0x140] sm:$0xff]
    %v469 = vld [vmem:[#allocation5 + $0x148] sm:$0xff]
    %v470 = vld [vmem:[#allocation5 + $0x150] sm:$0xff]
    %v471 = vld [vmem:[#allocation5 + $0x158] sm:$0xff]
    %v472 = vld [vmem:[#allocation5 + $0x160] sm:$0xff]
    %v473 = vld [vmem:[#allocation5 + $0x168] sm:$0xff]
    %v474 = vld [vmem:[#allocation5 + $0x170] sm:$0xff]
    %v475 = vld [vmem:[#allocation5 + $0x178] sm:$0xff]
    %v476 = vld [vmem:[#allocation5 + $0x180] sm:$0xff]
    %v477 = vld [vmem:[#allocation5 + $0x188] sm:$0xff]
    %v478 = vld [vmem:[#allocation5 + $0x190] sm:$0xff]
    %v479 = vld [vmem:[#allocation5 + $0x198] sm:$0xff]
    %v480 = vld [vmem:[#allocation5 + $0x1a0] sm:$0xff]
    %v481 = vld [vmem:[#allocation5 + $0x1a8] sm:$0xff]
    %v482 = vld [vmem:[#allocation5 + $0x1b0] sm:$0xff]
    %v483 = vld [vmem:[#allocation5 + $0x1b8] sm:$0xff]
    %v484 = vld [vmem:[#allocation5 + $0x1c0] sm:$0xff]
    %v485 = vld [vmem:[#allocation5 + $0x1c8] sm:$0xff]
    %v486 = vld [vmem:[#allocation5 + $0x1d0] sm:$0xff]
    %v487 = vld [vmem:[#allocation5 + $0x1d8] sm:$0xff]
    %v488 = vld [vmem:[#allocation5 + $0x1e0] sm:$0xff]
    %v489 = vld [vmem:[#allocation5 + $0x1e8] sm:$0xff]
    %v490 = vld [vmem:[#allocation5 + $0x1f0] sm:$0xff]
    %v491 = vld [vmem:[#allocation5 + $0x1f8] sm:$0xff]
    %v492 = vld [vmem:[#allocation5 + $0x200] sm:$0xff]
    %v493 = vld [vmem:[#allocation5 + $0x208] sm:$0xff]
    %v494 = vld [vmem:[#allocation5 + $0x210] sm:$0xff]
    %v495 = vld [vmem:[#allocation5 + $0x218] sm:$0xff]
    %v496 = vld [vmem:[#allocation5 + $0x220] sm:$0xff]
    %v497 = vld [vmem:[#allocation5 + $0x228] sm:$0xff]
    %v498 = vld [vmem:[#allocation5 + $0x230] sm:$0xff]
    %v499 = vld [vmem:[#allocation5 + $0x238] sm:$0xff]
    %v500 = vld [vmem:[#allocation5 + $0x240] sm:$0xff]
    %v501 = vld [vmem:[#allocation5 + $0x248] sm:$0xff]
    %v502 = vld [vmem:[#allocation5 + $0x250] sm:$0xff]
    %v503 = vld [vmem:[#allocation5 + $0x258] sm:$0xff]
    %v504 = vld [vmem:[#allocation5 + $0x260] sm:$0xff]
    %v505 = vld [vmem:[#allocation5 + $0x268] sm:$0xff]
    %v506 = vld [vmem:[#allocation5 + $0x270] sm:$0xff]
    %v507 = vld [vmem:[#allocation5 + $0x278] sm:$0xff]
    %v508 = vld [vmem:[#allocation5 + $0x280] sm:$0xff]
    %v509 = vld [vmem:[#allocation5 + $0x288] sm:$0xff]
    %v510 = vld [vmem:[#allocation5 + $0x290] sm:$0xff]
    %v511 = vld [vmem:[#allocation5 + $0x298] sm:$0xff]
    %v512 = vld [vmem:[#allocation5 + $0x2a0] sm:$0xff]
    %v513 = vld [vmem:[#allocation5 + $0x2a8] sm:$0xff]
    %v514 = vld [vmem:[#allocation5 + $0x2b0] sm:$0xff]
    %v515 = vld [vmem:[#allocation5 + $0x2b8] sm:$0xff]
    %v516 = vld [vmem:[#allocation5 + $0x2c0] sm:$0xff]
    %v517 = vld [vmem:[#allocation5 + $0x2c8] sm:$0xff]
    %v518 = vld [vmem:[#allocation5 + $0x2d0] sm:$0xff]
    %v519 = vld [vmem:[#allocation5 + $0x2d8] sm:$0xff]
    %v520 = vld [vmem:[#allocation5 + $0x2e0] sm:$0xff]
    %v521 = vld [vmem:[#allocation5 + $0x2e8] sm:$0xff]
    %v522 = vld [vmem:[#allocation5 + $0x2f0] sm:$0xff]
    %v523 = vld [vmem:[#allocation5 + $0x2f8] sm:$0xff]
    %v524 = vld [vmem:[#allocation5 + $0x300] sm:$0xff]
    %v525 = vld [vmem:[#allocation5 + $0x308] sm:$0xff]
    %v526 = vld [vmem:[#allocation5 + $0x310] sm:$0xff]
    %v527 = vld [vmem:[#allocation5 + $0x318] sm:$0xff]
    %v528 = vld [vmem:[#allocation5 + $0x320] sm:$0xff]
    %v529 = vld [vmem:[#allocation5 + $0x328] sm:$0xff]
    %v530 = vld [vmem:[#allocation5 + $0x330] sm:$0xff]
    %v531 = vld [vmem:[#allocation5 + $0x338] sm:$0xff]
    %v532 = vld [vmem:[#allocation5 + $0x340] sm:$0xff]
    %v533 = vld [vmem:[#allocation5 + $0x348] sm:$0xff]
    %v534 = vld [vmem:[#allocation5 + $0x350] sm:$0xff]
    %v535 = vld [vmem:[#allocation5 + $0x358] sm:$0xff]
    %v536 = vld [vmem:[#allocation5 + $0x360] sm:$0xff]
    %v537 = vld [vmem:[#allocation5 + $0x368] sm:$0xff]
    %v538 = vld [vmem:[#allocation5 + $0x370] sm:$0xff]
    %v539 = vld [vmem:[#allocation5 + $0x378] sm:$0xff]
    %v540 = vld [vmem:[#allocation5 + $0x380] sm:$0xff]
    %v541 = vld [vmem:[#allocation5 + $0x388] sm:$0xff]
    %v542 = vld [vmem:[#allocation5 + $0x390] sm:$0xff]
    %v543 = vld [vmem:[#allocation5 + $0x398] sm:$0xff]
    %v544 = vld [vmem:[#allocation5 + $0x3a0] sm:$0xff]
    %v545 = vld [vmem:[#allocation5 + $0x3a8] sm:$0xff]
    %v546 = vld [vmem:[#allocation5 + $0x3b0] sm:$0xff]
    %v547 = vld [vmem:[#allocation5 + $0x3b8] sm:$0xff]
    %v548 = vld [vmem:[#allocation5 + $0x3c0] sm:$0xff]
    %v549 = vld [vmem:[#allocation5 + $0x3c8] sm:$0xff]
    %v550 = vld [vmem:[#allocation5 + $0x3d0] sm:$0xff]
    %v551 = vld [vmem:[#allocation5 + $0x3d8] sm:$0xff]
    %v552 = vld [vmem:[#allocation5 + $0x3e0] sm:$0xff]
    %v553 = vld [vmem:[#allocation5 + $0x3e8] sm:$0xff]
    %v554 = vld [vmem:[#allocation5 + $0x3f0] sm:$0xff]
    %v555 = vld [vmem:[#allocation5 + $0x3f8] sm:$0xff]
    %556 = vmatprep.subr.mxu0 %v429
    %557 = vmatpush1.xpose.msra.mxu0 %v428
    %558 = vmatprep.subr.mxu0 %v433
    %559 = vmatpush1.xpose.msra.mxu0 %v432
    %560 = vmatprep.subr.mxu0 %v437
    %561 = vmatpush1.xpose.msra.mxu0 %v436
    %562 = vmatprep.subr.mxu0 %v441
    %563 = vmatpush1.xpose.msra.mxu0 %v440
    %564 = vmatprep.subr.mxu0 %v445
    %565 = vmatpush1.xpose.msra.mxu0 %v444
    %566 = vmatprep.subr.mxu0 %v449
    %567 = vmatpush1.xpose.msra.mxu0 %v448
    %568 = vmatprep.subr.mxu0 %v453
    %569 = vmatpush1.xpose.msra.mxu0 %v452
    %570 = vmatprep.subr.mxu0 %v457
    %571 = vmatpush1.xpose.msra.mxu0 %v456
    %572 = vmatprep.subr.mxu0 %v461
    %573 = vmatpush1.xpose.msra.mxu0 %v460
    %574 = vmatprep.subr.mxu0 %v465
    %575 = vmatpush1.xpose.msra.mxu0 %v464
    %576 = vmatprep.subr.mxu0 %v469
    %577 = vmatpush1.xpose.msra.mxu0 %v468
    %578 = vmatprep.subr.mxu0 %v473
    %579 = vmatpush1.xpose.msra.mxu0 %v472
    %580 = vmatprep.subr.mxu0 %v477
    %581 = vmatpush1.xpose.msra.mxu0 %v476
    %582 = vmatprep.subr.mxu0 %v481
    %583 = vmatpush1.xpose.msra.mxu0 %v480
    %584 = vmatprep.subr.mxu0 %v485
    %585 = vmatpush1.xpose.msra.mxu0 %v484
    %586 = vmatprep.subr.mxu0 %v489
    %587 = vmatpush1.xpose.msra.mxu0 %v488
    %588 = vmatprep.subr.mxu0 %v493
    %589 = vmatpush1.xpose.msra.mxu0 %v492
    %590 = vmatprep.subr.mxu0 %v497
    %591 = vmatpush1.xpose.msra.mxu0 %v496
    %592 = vmatprep.subr.mxu0 %v501
    %593 = vmatpush1.xpose.msra.mxu0 %v500
    %594 = vmatprep.subr.mxu0 %v505
    %595 = vmatpush1.xpose.msra.mxu0 %v504
    %596 = vmatprep.subr.mxu0 %v509
    %597 = vmatpush1.xpose.msra.mxu0 %v508
    %598 = vmatprep.subr.mxu0 %v513
    %599 = vmatpush1.xpose.msra.mxu0 %v512
    %600 = vmatprep.subr.mxu0 %v517
    %601 = vmatpush1.xpose.msra.mxu0 %v516
    %602 = vmatprep.subr.mxu0 %v521
    %603 = vmatpush1.xpose.msra.mxu0 %v520
    %604 = vmatprep.subr.mxu0 %v525
    %605 = vmatpush1.xpose.msra.mxu0 %v524
    %606 = vmatprep.subr.mxu0 %v529
    %607 = vmatpush1.xpose.msra.mxu0 %v528
    %608 = vmatprep.subr.mxu0 %v533
    %609 = vmatpush1.xpose.msra.mxu0 %v532
    %610 = vmatprep.subr.mxu0 %v537
    %611 = vmatpush1.xpose.msra.mxu0 %v536
    %612 = vmatprep.subr.mxu0 %v541
    %613 = vmatpush1.xpose.msra.mxu0 %v540
    %614 = vmatprep.subr.mxu0 %v545
    %615 = vmatpush1.xpose.msra.mxu0 %v544
    %616 = vmatprep.subr.mxu0 %v549
    %617 = vmatpush1.xpose.msra.mxu0 %v548
    %618 = vmatprep.subr.mxu0 %v553
    %619 = vmatpush1.xpose.msra.mxu0 %v552
    %620 = vmatprep.mubr.f32.mxu0 %v237
    %621 = vmatmul.mubr.f32.gmra.mrb[0].mxu0 %v236
    %v622 = vpop.f32.mrb[0].mxu0
    %v623 = vadd.f32 0.0, %v622
    %v624 = vpop.f32.mrb[0].mxu0
    %v625 = vadd.f32 0.0, %v624
    %626 = vmatprep.mubr.f32.mxu0 %v241
    %627 = vmatmul.mubr.f32.gmra.mrb[0].mxu0 %v240
    %v628 = vpop.f32.mrb[0].mxu0
    %v629 = vadd.f32 0.0, %v628
    %v630 = vpop.f32.mrb[0].mxu0
    %v631 = vadd.f32 0.0, %v630
    %632 = vmatprep.mubr.f32.mxu0 %v245
    %633 = vmatmul.mubr.f32.gmra.mrb[0].mxu0 %v244
    %v634 = vpop.f32.mrb[0].mxu0
    %v635 = vadd.f32 0.0, %v634
    %v636 = vpop.f32.mrb[0].mxu0
    %v637 = vadd.f32 0.0, %v636
    %638 = vmatprep.mubr.f32.mxu0 %v249
    %639 = vmatmul.mubr.f32.gmra.mrb[0].mxu0 %v248
    %v640 = vpop.f32.mrb[0].mxu0
    %v641 = vadd.f32 0.0, %v640
    %v642 = vpop.f32.mrb[0].mxu0
    %v643 = vadd.f32 0.0, %v642
    %644 = vmatprep.mubr.f32.mxu0 %v253
    %645 = vmatmul.mubr.f32.gmra.mrb[0].mxu0 %v252
    %v646 = vpop.f32.mrb[0].mxu0
    %v647 = vadd.f32 0.0, %v646
    %v648 = vpop.f32.mrb[0].mxu0
    %v649 = vadd.f32 0.0, %v648
    %650 = vmatprep.mubr.f32.mxu0 %v257
    %651 = vmatmul.mubr.f32.gmra.mrb[0].mxu0 %v256
    %v652 = vpop.f32.mrb[0].mxu0
    %v653 = vadd.f32 0.0, %v652
    %v654 = vpop.f32.mrb[0].mxu0
    %v655 = vadd.f32 0.0, %v654
    %656 = vmatprep.mubr.f32.mxu0 %v261
    %657 = vmatmul.mubr.f32.gmra.mrb[0].mxu0 %v260
    %v658 = vpop.f32.mrb[0].mxu0
    %v659 = vadd.f32 0.0, %v658
    %v660 = vpop.f32.mrb[0].mxu0
    %v661 = vadd.f32 0.0, %v660
    %662 = vmatprep.mubr.f32.mxu0 %v265
    %663 = vmatmul.mubr.f32.gmra.mrb[0].mxu0 %v264
    %v664 = vpop.f32.mrb[0].mxu0
    %v665 = vadd.f32 0.0, %v664
    %v666 = vpop.f32.mrb[0].mxu0
    %v667 = vadd.f32 0.0, %v666
    %668 = vmatprep.mubr.f32.mxu0 %v269
    %669 = vmatmul.mubr.f32.gmra.mrb[0].mxu0 %v268
    %v670 = vpop.f32.mrb[0].mxu0
    %v671 = vadd.f32 0.0, %v670
    %v672 = vpop.f32.mrb[0].mxu0
    %v673 = vadd.f32 0.0, %v672
    %674 = vmatprep.mubr.f32.mxu0 %v273
    %675 = vmatmul.mubr.f32.gmra.mrb[0].mxu0 %v272
    %v676 = vpop.f32.mrb[0].mxu0
    %v677 = vadd.f32 0.0, %v676
    %v678 = vpop.f32.mrb[0].mxu0
    %v679 = vadd.f32 0.0, %v678
    %680 = vmatprep.mubr.f32.mxu0 %v277
    %681 = vmatmul.mubr.f32.gmra.mrb[0].mxu0 %v276
    %v682 = vpop.f32.mrb[0].mxu0
    %v683 = vadd.f32 0.0, %v682
    %v684 = vpop.f32.mrb[0].mxu0
    %v685 = vadd.f32 0.0, %v684
    %686 = vmatprep.mubr.f32.mxu0 %v281
    %687 = vmatmul.mubr.f32.gmra.mrb[0].mxu0 %v280
    %v688 = vpop.f32.mrb[0].mxu0
    %v689 = vadd.f32 0.0, %v688
    %v690 = vpop.f32.mrb[0].mxu0
    %v691 = vadd.f32 0.0, %v690
    %692 = vmatprep.mubr.f32.mxu0 %v285
    %693 = vmatmul.mubr.f32.gmra.mrb[0].mxu0 %v284
    %v694 = vpop.f32.mrb[0].mxu0
    %v695 = vadd.f32 0.0, %v694
    %v696 = vpop.f32.mrb[0].mxu0
    %v697 = vadd.f32 0.0, %v696
    %698 = vmatprep.mubr.f32.mxu0 %v289
    %699 = vmatmul.mubr.f32.gmra.mrb[0].mxu0 %v288
    %v700 = vpop.f32.mrb[0].mxu0
    %v701 = vadd.f32 0.0, %v700
    %v702 = vpop.f32.mrb[0].mxu0
    %v703 = vadd.f32 0.0, %v702
    %704 = vmatprep.mubr.f32.mxu0 %v293
    %705 = vmatmul.mubr.f32.gmra.mrb[0].mxu0 %v292
    %v706 = vpop.f32.mrb[0].mxu0
    %v707 = vadd.f32 0.0, %v706
    %v708 = vpop.f32.mrb[0].mxu0
    %v709 = vadd.f32 0.0, %v708
    %710 = vmatprep.mubr.f32.mxu0 %v297
    %711 = vmatmul.mubr.f32.gmra.mrb[0].mxu0 %v296
    %v712 = vpop.f32.mrb[0].mxu0
    %v713 = vadd.f32 0.0, %v712
    %v714 = vpop.f32.mrb[0].mxu0
    %v715 = vadd.f32 0.0, %v714
    %716 = vmatprep.mubr.f32.mxu0 %v301
    %717 = vmatmul.mubr.f32.gmra.mrb[0].mxu0 %v300
    %v718 = vpop.f32.mrb[0].mxu0
    %v719 = vadd.f32 0.0, %v718
    %v720 = vpop.f32.mrb[0].mxu0
    %v721 = vadd.f32 0.0, %v720
    %722 = vmatprep.mubr.f32.mxu0 %v305
    %723 = vmatmul.mubr.f32.gmra.mrb[0].mxu0 %v304
    %v724 = vpop.f32.mrb[0].mxu0
    %v725 = vadd.f32 0.0, %v724
    %v726 = vpop.f32.mrb[0].mxu0
    %v727 = vadd.f32 0.0, %v726
    %728 = vmatprep.mubr.f32.mxu0 %v309
    %729 = vmatmul.mubr.f32.gmra.mrb[0].mxu0 %v308
    %v730 = vpop.f32.mrb[0].mxu0
    %v731 = vadd.f32 0.0, %v730
    %v732 = vpop.f32.mrb[0].mxu0
    %v733 = vadd.f32 0.0, %v732
    %734 = vmatprep.mubr.f32.mxu0 %v313
    %735 = vmatmul.mubr.f32.gmra.mrb[0].mxu0 %v312
    %v736 = vpop.f32.mrb[0].mxu0
    %v737 = vadd.f32 0.0, %v736
    %v738 = vpop.f32.mrb[0].mxu0
    %v739 = vadd.f32 0.0, %v738
    %740 = vmatprep.mubr.f32.mxu0 %v317
    %741 = vmatmul.mubr.f32.gmra.mrb[0].mxu0 %v316
    %v742 = vpop.f32.mrb[0].mxu0
    %v743 = vadd.f32 0.0, %v742
    %v744 = vpop.f32.mrb[0].mxu0
    %v745 = vadd.f32 0.0, %v744
    %746 = vmatprep.mubr.f32.mxu0 %v321
    %747 = vmatmul.mubr.f32.gmra.mrb[0].mxu0 %v320
    %v748 = vpop.f32.mrb[0].mxu0
    %v749 = vadd.f32 0.0, %v748
    %v750 = vpop.f32.mrb[0].mxu0
    %v751 = vadd.f32 0.0, %v750
    %752 = vmatprep.mubr.f32.mxu0 %v325
    %753 = vmatmul.mubr.f32.gmra.mrb[0].mxu0 %v324
    %v754 = vpop.f32.mrb[0].mxu0
    %v755 = vadd.f32 0.0, %v754
    %v756 = vpop.f32.mrb[0].mxu0
    %v757 = vadd.f32 0.0, %v756
    %758 = vmatprep.mubr.f32.mxu0 %v329
    %759 = vmatmul.mubr.f32.gmra.mrb[0].mxu0 %v328
    %v760 = vpop.f32.mrb[0].mxu0
    %v761 = vadd.f32 0.0, %v760
    %v762 = vpop.f32.mrb[0].mxu0
    %v763 = vadd.f32 0.0, %v762
    %764 = vmatprep.mubr.f32.mxu0 %v333
    %765 = vmatmul.mubr.f32.gmra.mrb[0].mxu0 %v332
    %v766 = vpop.f32.mrb[0].mxu0
    %v767 = vadd.f32 0.0, %v766
    %v768 = vpop.f32.mrb[0].mxu0
    %v769 = vadd.f32 0.0, %v768
    %770 = vmatprep.mubr.f32.mxu0 %v337
    %771 = vmatmul.mubr.f32.gmra.mrb[0].mxu0 %v336
    %v772 = vpop.f32.mrb[0].mxu0
    %v773 = vadd.f32 0.0, %v772
    %v774 = vpop.f32.mrb[0].mxu0
    %v775 = vadd.f32 0.0, %v774
    %776 = vmatprep.mubr.f32.mxu0 %v341
    %777 = vmatmul.mubr.f32.gmra.mrb[0].mxu0 %v340
    %v778 = vpop.f32.mrb[0].mxu0
    %v779 = vadd.f32 0.0, %v778
    %v780 = vpop.f32.mrb[0].mxu0
    %v781 = vadd.f32 0.0, %v780
    %782 = vmatprep.mubr.f32.mxu0 %v345
    %783 = vmatmul.mubr.f32.gmra.mrb[0].mxu0 %v344
    %v784 = vpop.f32.mrb[0].mxu0
    %v785 = vadd.f32 0.0, %v784
    %v786 = vpop.f32.mrb[0].mxu0
    %v787 = vadd.f32 0.0, %v786
    %788 = vmatprep.mubr.f32.mxu0 %v349
    %789 = vmatmul.mubr.f32.gmra.mrb[0].mxu0 %v348
    %v790 = vpop.f32.mrb[0].mxu0
    %v791 = vadd.f32 0.0, %v790
    %v792 = vpop.f32.mrb[0].mxu0
    %v793 = vadd.f32 0.0, %v792
    %794 = vmatprep.mubr.f32.mxu0 %v353
    %795 = vmatmul.mubr.f32.gmra.mrb[0].mxu0 %v352
    %v796 = vpop.f32.mrb[0].mxu0
    %v797 = vadd.f32 0.0, %v796
    %v798 = vpop.f32.mrb[0].mxu0
    %v799 = vadd.f32 0.0, %v798
    %800 = vmatprep.mubr.f32.mxu0 %v357
    %801 = vmatmul.mubr.f32.gmra.mrb[0].mxu0 %v356
    %v802 = vpop.f32.mrb[0].mxu0
    %v803 = vadd.f32 0.0, %v802
    %v804 = vpop.f32.mrb[0].mxu0
    %v805 = vadd.f32 0.0, %v804
    %806 = vmatprep.mubr.f32.mxu0 %v361
    %807 = vmatmul.mubr.f32.gmra.mrb[0].mxu0 %v360
    %v808 = vpop.f32.mrb[0].mxu0
    %v809 = vadd.f32 0.0, %v808
    %v810 = vpop.f32.mrb[0].mxu0
    %v811 = vadd.f32 0.0, %v810
    %812 = vmatprep.mubr.f32.mxu0 %v365
    %813 = vmatmul.mubr.f32.gmra.mrb[0].mxu0 %v364
    %v814 = vpop.f32.mrb[0].mxu0
    %v815 = vadd.f32 0.0, %v814
    %v816 = vpop.f32.mrb[0].mxu0
    %v817 = vadd.f32 0.0, %v816
    %818 = vmatprep.mubr.f32.mxu0 %v369
    %819 = vmatmul.mubr.f32.gmra.mrb[0].mxu0 %v368
    %v820 = vpop.f32.mrb[0].mxu0
    %v821 = vadd.f32 0.0, %v820
    %v822 = vpop.f32.mrb[0].mxu0
    %v823 = vadd.f32 0.0, %v822
    %824 = vmatprep.mubr.f32.mxu0 %v373
    %825 = vmatmul.mubr.f32.gmra.mrb[0].mxu0 %v372
    %v826 = vpop.f32.mrb[0].mxu0
    %v827 = vadd.f32 0.0, %v826
    %v828 = vpop.f32.mrb[0].mxu0
    %v829 = vadd.f32 0.0, %v828
    %830 = vmatprep.mubr.f32.mxu0 %v377
    %831 = vmatmul.mubr.f32.gmra.mrb[0].mxu0 %v376
    %v832 = vpop.f32.mrb[0].mxu0
    %v833 = vadd.f32 0.0, %v832
    %v834 = vpop.f32.mrb[0].mxu0
    %v835 = vadd.f32 0.0, %v834
    %836 = vmatprep.mubr.f32.mxu0 %v381
    %837 = vmatmul.mubr.f32.gmra.mrb[0].mxu0 %v380
    %v838 = vpop.f32.mrb[0].mxu0
    %v839 = vadd.f32 0.0, %v838
    %v840 = vpop.f32.mrb[0].mxu0
    %v841 = vadd.f32 0.0, %v840
    %842 = vmatprep.mubr.f32.mxu0 %v385
    %843 = vmatmul.mubr.f32.gmra.mrb[0].mxu0 %v384
    %v844 = vpop.f32.mrb[0].mxu0
    %v845 = vadd.f32 0.0, %v844
    %v846 = vpop.f32.mrb[0].mxu0
    %v847 = vadd.f32 0.0, %v846
    %848 = vmatprep.mubr.f32.mxu0 %v389
    %849 = vmatmul.mubr.f32.gmra.mrb[0].mxu0 %v388
    %v850 = vpop.f32.mrb[0].mxu0
    %v851 = vadd.f32 0.0, %v850
    %v852 = vpop.f32.mrb[0].mxu0
    %v853 = vadd.f32 0.0, %v852
    %854 = vmatprep.mubr.f32.mxu0 %v393
    %855 = vmatmul.mubr.f32.gmra.mrb[0].mxu0 %v392
    %v856 = vpop.f32.mrb[0].mxu0
    %v857 = vadd.f32 0.0, %v856
    %v858 = vpop.f32.mrb[0].mxu0
    %v859 = vadd.f32 0.0, %v858
    %860 = vmatprep.mubr.f32.mxu0 %v397
    %861 = vmatmul.mubr.f32.gmra.mrb[0].mxu0 %v396
    %v862 = vpop.f32.mrb[0].mxu0
    %v863 = vadd.f32 0.0, %v862
    %v864 = vpop.f32.mrb[0].mxu0
    %v865 = vadd.f32 0.0, %v864
    %866 = vmatprep.mubr.f32.mxu0 %v401
    %867 = vmatmul.mubr.f32.gmra.mrb[0].mxu0 %v400
    %v868 = vpop.f32.mrb[0].mxu0
    %v869 = vadd.f32 0.0, %v868
    %v870 = vpop.f32.mrb[0].mxu0
    %v871 = vadd.f32 0.0, %v870
    %872 = vmatprep.mubr.f32.mxu0 %v405
    %873 = vmatmul.mubr.f32.gmra.mrb[0].mxu0 %v404
    %v874 = vpop.f32.mrb[0].mxu0
    %v875 = vadd.f32 0.0, %v874
    %v876 = vpop.f32.mrb[0].mxu0
    %v877 = vadd.f32 0.0, %v876
    %878 = vmatprep.mubr.f32.mxu0 %v409
    %879 = vmatmul.mubr.f32.gmra.mrb[0].mxu0 %v408
    %v880 = vpop.f32.mrb[0].mxu0
    %v881 = vadd.f32 0.0, %v880
    %v882 = vpop.f32.mrb[0].mxu0
    %v883 = vadd.f32 0.0, %v882
    %884 = vmatprep.mubr.f32.mxu0 %v413
    %885 = vmatmul.mubr.f32.gmra.mrb[0].mxu0 %v412
    %v886 = vpop.f32.mrb[0].mxu0
    %v887 = vadd.f32 0.0, %v886
    %v888 = vpop.f32.mrb[0].mxu0
    %v889 = vadd.f32 0.0, %v888
    %890 = vmatprep.mubr.f32.mxu0 %v417
    %891 = vmatmul.mubr.f32.gmra.mrb[0].mxu0 %v416
    %v892 = vpop.f32.mrb[0].mxu0
    %v893 = vadd.f32 0.0, %v892
    %v894 = vpop.f32.mrb[0].mxu0
    %v895 = vadd.f32 0.0, %v894
    %896 = vmatprep.mubr.f32.mxu0 %v421
    %897 = vmatmul.mubr.f32.gmra.mrb[0].mxu0 %v420
    %v898 = vpop.f32.mrb[0].mxu0
    %v899 = vadd.f32 0.0, %v898
    %v900 = vpop.f32.mrb[0].mxu0
    %v901 = vadd.f32 0.0, %v900
    %902 = vmatprep.mubr.f32.mxu0 %v425
    %903 = vmatmul.mubr.f32.gmra.mrb[0].mxu0 %v424
    %v904 = vpop.f32.mrb[0].mxu0
    %v905 = vadd.f32 0.0, %v904
    %v906 = vpop.f32.mrb[0].mxu0
    %v907 = vadd.f32 0.0, %v906
    %908 = vdwg.mxu0
    %909 = vmatprep.subr.mxu0 %v431
    %910 = vmatpush1.xpose.msra.mxu0 %v430
    %911 = vmatprep.subr.mxu0 %v435
    %912 = vmatpush1.xpose.msra.mxu0 %v434
    %913 = vmatprep.subr.mxu0 %v439
    %914 = vmatpush1.xpose.msra.mxu0 %v438
    %915 = vmatprep.subr.mxu0 %v443
    %916 = vmatpush1.xpose.msra.mxu0 %v442
    %917 = vmatprep.subr.mxu0 %v447
    %918 = vmatpush1.xpose.msra.mxu0 %v446
    %919 = vmatprep.subr.mxu0 %v451
    %920 = vmatpush1.xpose.msra.mxu0 %v450
    %921 = vmatprep.subr.mxu0 %v455
    %922 = vmatpush1.xpose.msra.mxu0 %v454
    %923 = vmatprep.subr.mxu0 %v459
    %924 = vmatpush1.xpose.msra.mxu0 %v458
    %925 = vmatprep.subr.mxu0 %v463
    %926 = vmatpush1.xpose.msra.mxu0 %v462
    %927 = vmatprep.subr.mxu0 %v467
    %928 = vmatpush1.xpose.msra.mxu0 %v466
    %929 = vmatprep.subr.mxu0 %v471
    %930 = vmatpush1.xpose.msra.mxu0 %v470
    %931 = vmatprep.subr.mxu0 %v475
    %932 = vmatpush1.xpose.msra.mxu0 %v474
    %933 = vmatprep.subr.mxu0 %v479
    %934 = vmatpush1.xpose.msra.mxu0 %v478
    %935 = vmatprep.subr.mxu0 %v483
    %936 = vmatpush1.xpose.msra.mxu0 %v482
    %937 = vmatprep.subr.mxu0 %v487
    %938 = vmatpush1.xpose.msra.mxu0 %v486
    %939 = vmatprep.subr.mxu0 %v491
    %940 = vmatpush1.xpose.msra.mxu0 %v490
    %941 = vmatprep.subr.mxu0 %v495
    %942 = vmatpush1.xpose.msra.mxu0 %v494
    %943 = vmatprep.subr.mxu0 %v499
    %944 = vmatpush1.xpose.msra.mxu0 %v498
    %945 = vmatprep.subr.mxu0 %v503
    %946 = vmatpush1.xpose.msra.mxu0 %v502
    %947 = vmatprep.subr.mxu0 %v507
    %948 = vmatpush1.xpose.msra.mxu0 %v506
    %949 = vmatprep.subr.mxu0 %v511
    %950 = vmatpush1.xpose.msra.mxu0 %v510
    %951 = vmatprep.subr.mxu0 %v515
    %952 = vmatpush1.xpose.msra.mxu0 %v514
    %953 = vmatprep.subr.mxu0 %v519
    %954 = vmatpush1.xpose.msra.mxu0 %v518
    %955 = vmatprep.subr.mxu0 %v523
    %956 = vmatpush1.xpose.msra.mxu0 %v522
    %957 = vmatprep.subr.mxu0 %v527
    %958 = vmatpush1.xpose.msra.mxu0 %v526
    %959 = vmatprep.subr.mxu0 %v531
    %960 = vmatpush1.xpose.msra.mxu0 %v530
    %961 = vmatprep.subr.mxu0 %v535
    %962 = vmatpush1.xpose.msra.mxu0 %v534
    %963 = vmatprep.subr.mxu0 %v539
    %964 = vmatpush1.xpose.msra.mxu0 %v538
    %965 = vmatprep.subr.mxu0 %v543
    %966 = vmatpush1.xpose.msra.mxu0 %v542
    %967 = vmatprep.subr.mxu0 %v547
    %968 = vmatpush1.xpose.msra.mxu0 %v546
    %969 = vmatprep.subr.mxu0 %v551
    %970 = vmatpush1.xpose.msra.mxu0 %v550
    %971 = vmatprep.subr.mxu0 %v555
    %972 = vmatpush1.xpose.msra.mxu0 %v554
    %973 = vmatprep.mubr.f32.mxu0 %v239
    %974 = vmatmul.mubr.f32.gmra.mrb[0].mxu0 %v238
    %v975 = vpop.f32.mrb[0].mxu0
    %v976 = vadd.f32 %v623, %v975
    %v977 = vpop.f32.mrb[0].mxu0
    %v978 = vadd.f32 %v625, %v977
    %979 = vmatprep.mubr.f32.mxu0 %v243
    %980 = vmatmul.mubr.f32.gmra.mrb[0].mxu0 %v242
    %v981 = vpop.f32.mrb[0].mxu0
    %v982 = vadd.f32 %v629, %v981
    %v983 = vpop.f32.mrb[0].mxu0
    %v984 = vadd.f32 %v631, %v983
    %985 = vmatprep.mubr.f32.mxu0 %v247
    %986 = vmatmul.mubr.f32.gmra.mrb[0].mxu0 %v246
    %v987 = vpop.f32.mrb[0].mxu0
    %v988 = vadd.f32 %v635, %v987
    %v989 = vpop.f32.mrb[0].mxu0
    %v990 = vadd.f32 %v637, %v989
    %991 = vmatprep.mubr.f32.mxu0 %v251
    %992 = vmatmul.mubr.f32.gmra.mrb[0].mxu0 %v250
    %v993 = vpop.f32.mrb[0].mxu0
    %v994 = vadd.f32 %v641, %v993
    %v995 = vpop.f32.mrb[0].mxu0
    %v996 = vadd.f32 %v643, %v995
    %997 = vmatprep.mubr.f32.mxu0 %v255
    %998 = vmatmul.mubr.f32.gmra.mrb[0].mxu0 %v254
    %v999 = vpop.f32.mrb[0].mxu0
    %v1000 = vadd.f32 %v647, %v999
    %v1001 = vpop.f32.mrb[0].mxu0
    %v1002 = vadd.f32 %v649, %v1001
    %1003 = vmatprep.mubr.f32.mxu0 %v259
    %1004 = vmatmul.mubr.f32.gmra.mrb[0].mxu0 %v258
    %v1005 = vpop.f32.mrb[0].mxu0
    %v1006 = vadd.f32 %v653, %v1005
    %v1007 = vpop.f32.mrb[0].mxu0
    %v1008 = vadd.f32 %v655, %v1007
    %1009 = vmatprep.mubr.f32.mxu0 %v263
    %1010 = vmatmul.mubr.f32.gmra.mrb[0].mxu0 %v262
    %v1011 = vpop.f32.mrb[0].mxu0
    %v1012 = vadd.f32 %v659, %v1011
    %v1013 = vpop.f32.mrb[0].mxu0
    %v1014 = vadd.f32 %v661, %v1013
    %1015 = vmatprep.mubr.f32.mxu0 %v267
    %1016 = vmatmul.mubr.f32.gmra.mrb[0].mxu0 %v266
    %v1017 = vpop.f32.mrb[0].mxu0
    %v1018 = vadd.f32 %v665, %v1017
    %v1019 = vpop.f32.mrb[0].mxu0
    %v1020 = vadd.f32 %v667, %v1019
    %1021 = vmatprep.mubr.f32.mxu0 %v271
    %1022 = vmatmul.mubr.f32.gmra.mrb[0].mxu0 %v270
    %v1023 = vpop.f32.mrb[0].mxu0
    %v1024 = vadd.f32 %v671, %v1023
    %v1025 = vpop.f32.mrb[0].mxu0
    %v1026 = vadd.f32 %v673, %v1025
    %1027 = vmatprep.mubr.f32.mxu0 %v275
    %1028 = vmatmul.mubr.f32.gmra.mrb[0].mxu0 %v274
    %v1029 = vpop.f32.mrb[0].mxu0
    %v1030 = vadd.f32 %v677, %v1029
    %v1031 = vpop.f32.mrb[0].mxu0
    %v1032 = vadd.f32 %v679, %v1031
    %1033 = vmatprep.mubr.f32.mxu0 %v279
    %1034 = vmatmul.mubr.f32.gmra.mrb[0].mxu0 %v278
    %v1035 = vpop.f32.mrb[0].mxu0
    %v1036 = vadd.f32 %v683, %v1035
    %v1037 = vpop.f32.mrb[0].mxu0
    %v1038 = vadd.f32 %v685, %v1037
    %1039 = vmatprep.mubr.f32.mxu0 %v283
    %1040 = vmatmul.mubr.f32.gmra.mrb[0].mxu0 %v282
    %v1041 = vpop.f32.mrb[0].mxu0
    %v1042 = vadd.f32 %v689, %v1041
    %v1043 = vpop.f32.mrb[0].mxu0
    %v1044 = vadd.f32 %v691, %v1043
    %1045 = vmatprep.mubr.f32.mxu0 %v287
    %1046 = vmatmul.mubr.f32.gmra.mrb[0].mxu0 %v286
    %v1047 = vpop.f32.mrb[0].mxu0
    %v1048 = vadd.f32 %v695, %v1047
    %v1049 = vpop.f32.mrb[0].mxu0
    %v1050 = vadd.f32 %v697, %v1049
    %1051 = vmatprep.mubr.f32.mxu0 %v291
    %1052 = vmatmul.mubr.f32.gmra.mrb[0].mxu0 %v290
    %v1053 = vpop.f32.mrb[0].mxu0
    %v1054 = vadd.f32 %v701, %v1053
    %v1055 = vpop.f32.mrb[0].mxu0
    %v1056 = vadd.f32 %v703, %v1055
    %1057 = vmatprep.mubr.f32.mxu0 %v295
    %1058 = vmatmul.mubr.f32.gmra.mrb[0].mxu0 %v294
    %v1059 = vpop.f32.mrb[0].mxu0
    %v1060 = vadd.f32 %v707, %v1059
    %v1061 = vpop.f32.mrb[0].mxu0
    %v1062 = vadd.f32 %v709, %v1061
    %1063 = vmatprep.mubr.f32.mxu0 %v299
    %1064 = vmatmul.mubr.f32.gmra.mrb[0].mxu0 %v298
    %v1065 = vpop.f32.mrb[0].mxu0
    %v1066 = vadd.f32 %v713, %v1065
    %v1067 = vpop.f32.mrb[0].mxu0
    %v1068 = vadd.f32 %v715, %v1067
    %1069 = vmatprep.mubr.f32.mxu0 %v303
    %1070 = vmatmul.mubr.f32.gmra.mrb[0].mxu0 %v302
    %v1071 = vpop.f32.mrb[0].mxu0
    %v1072 = vadd.f32 %v719, %v1071
    %v1073 = vpop.f32.mrb[0].mxu0
    %v1074 = vadd.f32 %v721, %v1073
    %1075 = vmatprep.mubr.f32.mxu0 %v307
    %1076 = vmatmul.mubr.f32.gmra.mrb[0].mxu0 %v306
    %v1077 = vpop.f32.mrb[0].mxu0
    %v1078 = vadd.f32 %v725, %v1077
    %v1079 = vpop.f32.mrb[0].mxu0
    %v1080 = vadd.f32 %v727, %v1079
    %1081 = vmatprep.mubr.f32.mxu0 %v311
    %1082 = vmatmul.mubr.f32.gmra.mrb[0].mxu0 %v310
    %v1083 = vpop.f32.mrb[0].mxu0
    %v1084 = vadd.f32 %v731, %v1083
    %v1085 = vpop.f32.mrb[0].mxu0
    %v1086 = vadd.f32 %v733, %v1085
    %1087 = vmatprep.mubr.f32.mxu0 %v315
    %1088 = vmatmul.mubr.f32.gmra.mrb[0].mxu0 %v314
    %v1089 = vpop.f32.mrb[0].mxu0
    %v1090 = vadd.f32 %v737, %v1089
    %v1091 = vpop.f32.mrb[0].mxu0
    %v1092 = vadd.f32 %v739, %v1091
    %1093 = vmatprep.mubr.f32.mxu0 %v319
    %1094 = vmatmul.mubr.f32.gmra.mrb[0].mxu0 %v318
    %v1095 = vpop.f32.mrb[0].mxu0
    %v1096 = vadd.f32 %v743, %v1095
    %v1097 = vpop.f32.mrb[0].mxu0
    %v1098 = vadd.f32 %v745, %v1097
    %1099 = vmatprep.mubr.f32.mxu0 %v323
    %1100 = vmatmul.mubr.f32.gmra.mrb[0].mxu0 %v322
    %v1101 = vpop.f32.mrb[0].mxu0
    %v1102 = vadd.f32 %v749, %v1101
    %v1103 = vpop.f32.mrb[0].mxu0
    %v1104 = vadd.f32 %v751, %v1103
    %1105 = vmatprep.mubr.f32.mxu0 %v327
    %1106 = vmatmul.mubr.f32.gmra.mrb[0].mxu0 %v326
    %v1107 = vpop.f32.mrb[0].mxu0
    %v1108 = vadd.f32 %v755, %v1107
    %v1109 = vpop.f32.mrb[0].mxu0
    %v1110 = vadd.f32 %v757, %v1109
    %1111 = vmatprep.mubr.f32.mxu0 %v331
    %1112 = vmatmul.mubr.f32.gmra.mrb[0].mxu0 %v330
    %v1113 = vpop.f32.mrb[0].mxu0
    %v1114 = vadd.f32 %v761, %v1113
    %v1115 = vpop.f32.mrb[0].mxu0
    %v1116 = vadd.f32 %v763, %v1115
    %1117 = vmatprep.mubr.f32.mxu0 %v335
    %1118 = vmatmul.mubr.f32.gmra.mrb[0].mxu0 %v334
    %v1119 = vpop.f32.mrb[0].mxu0
    %v1120 = vadd.f32 %v767, %v1119
    %v1121 = vpop.f32.mrb[0].mxu0
    %v1122 = vadd.f32 %v769, %v1121
    %1123 = vmatprep.mubr.f32.mxu0 %v339
    %1124 = vmatmul.mubr.f32.gmra.mrb[0].mxu0 %v338
    %v1125 = vpop.f32.mrb[0].mxu0
    %v1126 = vadd.f32 %v773, %v1125
    %v1127 = vpop.f32.mrb[0].mxu0
    %v1128 = vadd.f32 %v775, %v1127
    %1129 = vmatprep.mubr.f32.mxu0 %v343
    %1130 = vmatmul.mubr.f32.gmra.mrb[0].mxu0 %v342
    %v1131 = vpop.f32.mrb[0].mxu0
    %v1132 = vadd.f32 %v779, %v1131
    %v1133 = vpop.f32.mrb[0].mxu0
    %v1134 = vadd.f32 %v781, %v1133
    %1135 = vmatprep.mubr.f32.mxu0 %v347
    %1136 = vmatmul.mubr.f32.gmra.mrb[0].mxu0 %v346
    %v1137 = vpop.f32.mrb[0].mxu0
    %v1138 = vadd.f32 %v785, %v1137
    %v1139 = vpop.f32.mrb[0].mxu0
    %v1140 = vadd.f32 %v787, %v1139
    %1141 = vmatprep.mubr.f32.mxu0 %v351
    %1142 = vmatmul.mubr.f32.gmra.mrb[0].mxu0 %v350
    %v1143 = vpop.f32.mrb[0].mxu0
    %v1144 = vadd.f32 %v791, %v1143
    %v1145 = vpop.f32.mrb[0].mxu0
    %v1146 = vadd.f32 %v793, %v1145
    %1147 = vmatprep.mubr.f32.mxu0 %v355
    %1148 = vmatmul.mubr.f32.gmra.mrb[0].mxu0 %v354
    %v1149 = vpop.f32.mrb[0].mxu0
    %v1150 = vadd.f32 %v797, %v1149
    %v1151 = vpop.f32.mrb[0].mxu0
    %v1152 = vadd.f32 %v799, %v1151
    %1153 = vmatprep.mubr.f32.mxu0 %v359
    %1154 = vmatmul.mubr.f32.gmra.mrb[0].mxu0 %v358
    %v1155 = vpop.f32.mrb[0].mxu0
    %v1156 = vadd.f32 %v803, %v1155
    %v1157 = vpop.f32.mrb[0].mxu0
    %v1158 = vadd.f32 %v805, %v1157
    %1159 = vmatprep.mubr.f32.mxu0 %v363
    %1160 = vmatmul.mubr.f32.gmra.mrb[0].mxu0 %v362
    %v1161 = vpop.f32.mrb[0].mxu0
    %v1162 = vadd.f32 %v809, %v1161
    %v1163 = vpop.f32.mrb[0].mxu0
    %v1164 = vadd.f32 %v811, %v1163
    %1165 = vmatprep.mubr.f32.mxu0 %v367
    %1166 = vmatmul.mubr.f32.gmra.mrb[0].mxu0 %v366
    %v1167 = vpop.f32.mrb[0].mxu0
    %v1168 = vadd.f32 %v815, %v1167
    %v1169 = vpop.f32.mrb[0].mxu0
    %v1170 = vadd.f32 %v817, %v1169
    %1171 = vmatprep.mubr.f32.mxu0 %v371
    %1172 = vmatmul.mubr.f32.gmra.mrb[0].mxu0 %v370
    %v1173 = vpop.f32.mrb[0].mxu0
    %v1174 = vadd.f32 %v821, %v1173
    %v1175 = vpop.f32.mrb[0].mxu0
    %v1176 = vadd.f32 %v823, %v1175
    %1177 = vmatprep.mubr.f32.mxu0 %v375
    %1178 = vmatmul.mubr.f32.gmra.mrb[0].mxu0 %v374
    %v1179 = vpop.f32.mrb[0].mxu0
    %v1180 = vadd.f32 %v827, %v1179
    %v1181 = vpop.f32.mrb[0].mxu0
    %v1182 = vadd.f32 %v829, %v1181
    %1183 = vmatprep.mubr.f32.mxu0 %v379
    %1184 = vmatmul.mubr.f32.gmra.mrb[0].mxu0 %v378
    %v1185 = vpop.f32.mrb[0].mxu0
    %v1186 = vadd.f32 %v833, %v1185
    %v1187 = vpop.f32.mrb[0].mxu0
    %v1188 = vadd.f32 %v835, %v1187
    %1189 = vmatprep.mubr.f32.mxu0 %v383
    %1190 = vmatmul.mubr.f32.gmra.mrb[0].mxu0 %v382
    %v1191 = vpop.f32.mrb[0].mxu0
    %v1192 = vadd.f32 %v839, %v1191
    %v1193 = vpop.f32.mrb[0].mxu0
    %v1194 = vadd.f32 %v841, %v1193
    %1195 = vmatprep.mubr.f32.mxu0 %v387
    %1196 = vmatmul.mubr.f32.gmra.mrb[0].mxu0 %v386
    %v1197 = vpop.f32.mrb[0].mxu0
    %v1198 = vadd.f32 %v845, %v1197
    %v1199 = vpop.f32.mrb[0].mxu0
    %v1200 = vadd.f32 %v847, %v1199
    %1201 = vmatprep.mubr.f32.mxu0 %v391
    %1202 = vmatmul.mubr.f32.gmra.mrb[0].mxu0 %v390
    %v1203 = vpop.f32.mrb[0].mxu0
    %v1204 = vadd.f32 %v851, %v1203
    %v1205 = vpop.f32.mrb[0].mxu0
    %v1206 = vadd.f32 %v853, %v1205
    %1207 = vmatprep.mubr.f32.mxu0 %v395
    %1208 = vmatmul.mubr.f32.gmra.mrb[0].mxu0 %v394
    %v1209 = vpop.f32.mrb[0].mxu0
    %v1210 = vadd.f32 %v857, %v1209
    %v1211 = vpop.f32.mrb[0].mxu0
    %v1212 = vadd.f32 %v859, %v1211
    %1213 = vmatprep.mubr.f32.mxu0 %v399
    %1214 = vmatmul.mubr.f32.gmra.mrb[0].mxu0 %v398
    %v1215 = vpop.f32.mrb[0].mxu0
    %v1216 = vadd.f32 %v863, %v1215
    %v1217 = vpop.f32.mrb[0].mxu0
    %v1218 = vadd.f32 %v865, %v1217
    %1219 = vmatprep.mubr.f32.mxu0 %v403
    %1220 = vmatmul.mubr.f32.gmra.mrb[0].mxu0 %v402
    %v1221 = vpop.f32.mrb[0].mxu0
    %v1222 = vadd.f32 %v869, %v1221
    %v1223 = vpop.f32.mrb[0].mxu0
    %v1224 = vadd.f32 %v871, %v1223
    %1225 = vmatprep.mubr.f32.mxu0 %v407
    %1226 = vmatmul.mubr.f32.gmra.mrb[0].mxu0 %v406
    %v1227 = vpop.f32.mrb[0].mxu0
    %v1228 = vadd.f32 %v875, %v1227
    %v1229 = vpop.f32.mrb[0].mxu0
    %v1230 = vadd.f32 %v877, %v1229
    %1231 = vmatprep.mubr.f32.mxu0 %v411
    %1232 = vmatmul.mubr.f32.gmra.mrb[0].mxu0 %v410
    %v1233 = vpop.f32.mrb[0].mxu0
    %v1234 = vadd.f32 %v881, %v1233
    %v1235 = vpop.f32.mrb[0].mxu0
    %v1236 = vadd.f32 %v883, %v1235
    %1237 = vmatprep.mubr.f32.mxu0 %v415
    %1238 = vmatmul.mubr.f32.gmra.mrb[0].mxu0 %v414
    %v1239 = vpop.f32.mrb[0].mxu0
    %v1240 = vadd.f32 %v887, %v1239
    %v1241 = vpop.f32.mrb[0].mxu0
    %v1242 = vadd.f32 %v889, %v1241
    %1243 = vmatprep.mubr.f32.mxu0 %v419
    %1244 = vmatmul.mubr.f32.gmra.mrb[0].mxu0 %v418
    %v1245 = vpop.f32.mrb[0].mxu0
    %v1246 = vadd.f32 %v893, %v1245
    %v1247 = vpop.f32.mrb[0].mxu0
    %v1248 = vadd.f32 %v895, %v1247
    %1249 = vmatprep.mubr.f32.mxu0 %v423
    %1250 = vmatmul.mubr.f32.gmra.mrb[0].mxu0 %v422
    %v1251 = vpop.f32.mrb[0].mxu0
    %v1252 = vadd.f32 %v899, %v1251
    %v1253 = vpop.f32.mrb[0].mxu0
    %v1254 = vadd.f32 %v901, %v1253
    %1255 = vmatprep.mubr.f32.mxu0 %v427
    %1256 = vmatmul.mubr.f32.gmra.mrb[0].mxu0 %v426
    %v1257 = vpop.f32.mrb[0].mxu0
    %v1258 = vadd.f32 %v905, %v1257
    %v1259 = vpop.f32.mrb[0].mxu0
    %v1260 = vadd.f32 %v907, %v1259
    %1261 = vdwg.mxu0
    %v1262 = vadd.f32 %v140, %v976
    %v1263 = vadd.f32 %v141, %v978
    %v1264 = vadd.f32 %v142, %v982
    %v1265 = vadd.f32 %v143, %v984
    %v1266 = vadd.f32 %v144, %v988
    %v1267 = vadd.f32 %v145, %v990
    %v1268 = vadd.f32 %v146, %v994
    %v1269 = vadd.f32 %v147, %v996
    %v1270 = vadd.f32 %v148, %v1000
    %v1271 = vadd.f32 %v149, %v1002
    %v1272 = vadd.f32 %v150, %v1006
    %v1273 = vadd.f32 %v151, %v1008
    %v1274 = vadd.f32 %v152, %v1012
    %v1275 = vadd.f32 %v153, %v1014
    %v1276 = vadd.f32 %v154, %v1018
    %v1277 = vadd.f32 %v155, %v1020
    %v1278 = vadd.f32 %v156, %v1024
    %v1279 = vadd.f32 %v157, %v1026
    %v1280 = vadd.f32 %v158, %v1030
    %v1281 = vadd.f32 %v159, %v1032
    %v1282 = vadd.f32 %v160, %v1036
    %v1283 = vadd.f32 %v161, %v1038
    %v1284 = vadd.f32 %v162, %v1042
    %v1285 = vadd.f32 %v163, %v1044
    %v1286 = vadd.f32 %v164, %v1048
    %v1287 = vadd.f32 %v165, %v1050
    %v1288 = vadd.f32 %v166, %v1054
    %v1289 = vadd.f32 %v167, %v1056
    %v1290 = vadd.f32 %v168, %v1060
    %v1291 = vadd.f32 %v169, %v1062
    %v1292 = vadd.f32 %v170, %v1066
    %v1293 = vadd.f32 %v171, %v1068
    %v1294 = vadd.f32 %v172, %v1072
    %v1295 = vadd.f32 %v173, %v1074
    %v1296 = vadd.f32 %v174, %v1078
    %v1297 = vadd.f32 %v175, %v1080
    %v1298 = vadd.f32 %v176, %v1084
    %v1299 = vadd.f32 %v177, %v1086
    %v1300 = vadd.f32 %v178, %v1090
    %v1301 = vadd.f32 %v179, %v1092
    %v1302 = vadd.f32 %v180, %v1096
    %v1303 = vadd.f32 %v181, %v1098
    %v1304 = vadd.f32 %v182, %v1102
    %v1305 = vadd.f32 %v183, %v1104
    %v1306 = vadd.f32 %v184, %v1108
    %v1307 = vadd.f32 %v185, %v1110
    %v1308 = vadd.f32 %v186, %v1114
    %v1309 = vadd.f32 %v187, %v1116
    %v1310 = vadd.f32 %v188, %v1120
    %v1311 = vadd.f32 %v189, %v1122
    %v1312 = vadd.f32 %v190, %v1126
    %v1313 = vadd.f32 %v191, %v1128
    %v1314 = vadd.f32 %v192, %v1132
    %v1315 = vadd.f32 %v193, %v1134
    %v1316 = vadd.f32 %v194, %v1138
    %v1317 = vadd.f32 %v195, %v1140
    %v1318 = vadd.f32 %v196, %v1144
    %v1319 = vadd.f32 %v197, %v1146
    %v1320 = vadd.f32 %v198, %v1150
    %v1321 = vadd.f32 %v199, %v1152
    %v1322 = vadd.f32 %v200, %v1156
    %v1323 = vadd.f32 %v201, %v1158
    %v1324 = vadd.f32 %v202, %v1162
    %v1325 = vadd.f32 %v203, %v1164
    %v1326 = vadd.f32 %v204, %v1168
    %v1327 = vadd.f32 %v205, %v1170
    %v1328 = vadd.f32 %v206, %v1174
    %v1329 = vadd.f32 %v207, %v1176
    %v1330 = vadd.f32 %v208, %v1180
    %v1331 = vadd.f32 %v209, %v1182
    %v1332 = vadd.f32 %v210, %v1186
    %v1333 = vadd.f32 %v211, %v1188
    %v1334 = vadd.f32 %v212, %v1192
    %v1335 = vadd.f32 %v213, %v1194
    %v1336 = vadd.f32 %v214, %v1198
    %v1337 = vadd.f32 %v215, %v1200
    %v1338 = vadd.f32 %v216, %v1204
    %v1339 = vadd.f32 %v217, %v1206
    %v1340 = vadd.f32 %v218, %v1210
    %v1341 = vadd.f32 %v219, %v1212
    %v1342 = vadd.f32 %v220, %v1216
    %v1343 = vadd.f32 %v221, %v1218
    %v1344 = vadd.f32 %v222, %v1222
    %v1345 = vadd.f32 %v223, %v1224
    %v1346 = vadd.f32 %v224, %v1228
    %v1347 = vadd.f32 %v225, %v1230
    %v1348 = vadd.f32 %v226, %v1234
    %v1349 = vadd.f32 %v227, %v1236
    %v1350 = vadd.f32 %v228, %v1240
    %v1351 = vadd.f32 %v229, %v1242
    %v1352 = vadd.f32 %v230, %v1246
    %v1353 = vadd.f32 %v231, %v1248
    %v1354 = vadd.f32 %v232, %v1252
    %v1355 = vadd.f32 %v233, %v1254
    %v1356 = vadd.f32 %v234, %v1258
    %v1357 = vadd.f32 %v235, %v1260
    %1358 = vst [vmem:[#allocation7] sm:$0xff] %v1262
    %1359 = vst [vmem:[#allocation7 + $0x8] sm:$0xff] %v1263
    %1360 = vst [vmem:[#allocation7 + $0x10] sm:$0xff] %v1264
    %1361 = vst [vmem:[#allocation7 + $0x18] sm:$0xff] %v1265
    %1362 = vst [vmem:[#allocation7 + $0x20] sm:$0xff] %v1266
    %1363 = vst [vmem:[#allocation7 + $0x28] sm:$0xff] %v1267
    %1364 = vst [vmem:[#allocation7 + $0x30] sm:$0xff] %v1268
    %1365 = vst [vmem:[#allocation7 + $0x38] sm:$0xff] %v1269
    %1366 = vst [vmem:[#allocation7 + $0x40] sm:$0xff] %v1270
    %1367 = vst [vmem:[#allocation7 + $0x48] sm:$0xff] %v1271
    %1368 = vst [vmem:[#allocation7 + $0x50] sm:$0xff] %v1272
    %1369 = vst [vmem:[#allocation7 + $0x58] sm:$0xff] %v1273
    %1370 = vst [vmem:[#allocation7 + $0x60] sm:$0xff] %v1274
    %1371 = vst [vmem:[#allocation7 + $0x68] sm:$0xff] %v1275
    %1372 = vst [vmem:[#allocation7 + $0x70] sm:$0xff] %v1276
    %1373 = vst [vmem:[#allocation7 + $0x78] sm:$0xff] %v1277
    %1374 = vst [vmem:[#allocation7 + $0x80] sm:$0xff] %v1278
    %1375 = vst [vmem:[#allocation7 + $0x88] sm:$0xff] %v1279
    %1376 = vst [vmem:[#allocation7 + $0x90] sm:$0xff] %v1280
    %1377 = vst [vmem:[#allocation7 + $0x98] sm:$0xff] %v1281
    %1378 = vst [vmem:[#allocation7 + $0xa0] sm:$0xff] %v1282
    %1379 = vst [vmem:[#allocation7 + $0xa8] sm:$0xff] %v1283
    %1380 = vst [vmem:[#allocation7 + $0xb0] sm:$0xff] %v1284
    %1381 = vst [vmem:[#allocation7 + $0xb8] sm:$0xff] %v1285
    %1382 = vst [vmem:[#allocation7 + $0xc0] sm:$0xff] %v1286
    %1383 = vst [vmem:[#allocation7 + $0xc8] sm:$0xff] %v1287
    %1384 = vst [vmem:[#allocation7 + $0xd0] sm:$0xff] %v1288
    %1385 = vst [vmem:[#allocation7 + $0xd8] sm:$0xff] %v1289
    %1386 = vst [vmem:[#allocation7 + $0xe0] sm:$0xff] %v1290
    %1387 = vst [vmem:[#allocation7 + $0xe8] sm:$0xff] %v1291
    %1388 = vst [vmem:[#allocation7 + $0xf0] sm:$0xff] %v1292
    %1389 = vst [vmem:[#allocation7 + $0xf8] sm:$0xff] %v1293
    %1390 = vst [vmem:[#allocation7 + $0x100] sm:$0xff] %v1294
    %1391 = vst [vmem:[#allocation7 + $0x108] sm:$0xff] %v1295
    %1392 = vst [vmem:[#allocation7 + $0x110] sm:$0xff] %v1296
    %1393 = vst [vmem:[#allocation7 + $0x118] sm:$0xff] %v1297
    %1394 = vst [vmem:[#allocation7 + $0x120] sm:$0xff] %v1298
    %1395 = vst [vmem:[#allocation7 + $0x128] sm:$0xff] %v1299
    %1396 = vst [vmem:[#allocation7 + $0x130] sm:$0xff] %v1300
    %1397 = vst [vmem:[#allocation7 + $0x138] sm:$0xff] %v1301
    %1398 = vst [vmem:[#allocation7 + $0x140] sm:$0xff] %v1302
    %1399 = vst [vmem:[#allocation7 + $0x148] sm:$0xff] %v1303
    %1400 = vst [vmem:[#allocation7 + $0x150] sm:$0xff] %v1304
    %1401 = vst [vmem:[#allocation7 + $0x158] sm:$0xff] %v1305
    %1402 = vst [vmem:[#allocation7 + $0x160] sm:$0xff] %v1306
    %1403 = vst [vmem:[#allocation7 + $0x168] sm:$0xff] %v1307
    %1404 = vst [vmem:[#allocation7 + $0x170] sm:$0xff] %v1308
    %1405 = vst [vmem:[#allocation7 + $0x178] sm:$0xff] %v1309
    %1406 = vst [vmem:[#allocation7 + $0x180] sm:$0xff] %v1310
    %1407 = vst [vmem:[#allocation7 + $0x188] sm:$0xff] %v1311
    %1408 = vst [vmem:[#allocation7 + $0x190] sm:$0xff] %v1312
    %1409 = vst [vmem:[#allocation7 + $0x198] sm:$0xff] %v1313
    %1410 = vst [vmem:[#allocation7 + $0x1a0] sm:$0xff] %v1314
    %1411 = vst [vmem:[#allocation7 + $0x1a8] sm:$0xff] %v1315
    %1412 = vst [vmem:[#allocation7 + $0x1b0] sm:$0xff] %v1316
    %1413 = vst [vmem:[#allocation7 + $0x1b8] sm:$0xff] %v1317
    %1414 = vst [vmem:[#allocation7 + $0x1c0] sm:$0xff] %v1318
    %1415 = vst [vmem:[#allocation7 + $0x1c8] sm:$0xff] %v1319
    %1416 = vst [vmem:[#allocation7 + $0x1d0] sm:$0xff] %v1320
    %1417 = vst [vmem:[#allocation7 + $0x1d8] sm:$0xff] %v1321
    %1418 = vst [vmem:[#allocation7 + $0x1e0] sm:$0xff] %v1322
    %1419 = vst [vmem:[#allocation7 + $0x1e8] sm:$0xff] %v1323
    %1420 = vst [vmem:[#allocation7 + $0x1f0] sm:$0xff] %v1324
    %1421 = vst [vmem:[#allocation7 + $0x1f8] sm:$0xff] %v1325
    %1422 = vst [vmem:[#allocation7 + $0x200] sm:$0xff] %v1326
    %1423 = vst [vmem:[#allocation7 + $0x208] sm:$0xff] %v1327
    %1424 = vst [vmem:[#allocation7 + $0x210] sm:$0xff] %v1328
    %1425 = vst [vmem:[#allocation7 + $0x218] sm:$0xff] %v1329
    %1426 = vst [vmem:[#allocation7 + $0x220] sm:$0xff] %v1330
    %1427 = vst [vmem:[#allocation7 + $0x228] sm:$0xff] %v1331
    %1428 = vst [vmem:[#allocation7 + $0x230] sm:$0xff] %v1332
    %1429 = vst [vmem:[#allocation7 + $0x238] sm:$0xff] %v1333
    %1430 = vst [vmem:[#allocation7 + $0x240] sm:$0xff] %v1334
    %1431 = vst [vmem:[#allocation7 + $0x248] sm:$0xff] %v1335
    %1432 = vst [vmem:[#allocation7 + $0x250] sm:$0xff] %v1336
    %1433 = vst [vmem:[#allocation7 + $0x258] sm:$0xff] %v1337
    %1434 = vst [vmem:[#allocation7 + $0x260] sm:$0xff] %v1338
    %1435 = vst [vmem:[#allocation7 + $0x268] sm:$0xff] %v1339
    %1436 = vst [vmem:[#allocation7 + $0x270] sm:$0xff] %v1340
    %1437 = vst [vmem:[#allocation7 + $0x278] sm:$0xff] %v1341
    %1438 = vst [vmem:[#allocation7 + $0x280] sm:$0xff] %v1342
    %1439 = vst [vmem:[#allocation7 + $0x288] sm:$0xff] %v1343
    %1440 = vst [vmem:[#allocation7 + $0x290] sm:$0xff] %v1344
    %1441 = vst [vmem:[#allocation7 + $0x298] sm:$0xff] %v1345
    %1442 = vst [vmem:[#allocation7 + $0x2a0] sm:$0xff] %v1346
    %1443 = vst [vmem:[#allocation7 + $0x2a8] sm:$0xff] %v1347
    %1444 = vst [vmem:[#allocation7 + $0x2b0] sm:$0xff] %v1348
    %1445 = vst [vmem:[#allocation7 + $0x2b8] sm:$0xff] %v1349
    %1446 = vst [vmem:[#allocation7 + $0x2c0] sm:$0xff] %v1350
    %1447 = vst [vmem:[#allocation7 + $0x2c8] sm:$0xff] %v1351
    %1448 = vst [vmem:[#allocation7 + $0x2d0] sm:$0xff] %v1352
    %1449 = vst [vmem:[#allocation7 + $0x2d8] sm:$0xff] %v1353
    %1450 = vst [vmem:[#allocation7 + $0x2e0] sm:$0xff] %v1354
    %1451 = vst [vmem:[#allocation7 + $0x2e8] sm:$0xff] %v1355
    %1452 = vst [vmem:[#allocation7 + $0x2f0] sm:$0xff] %v1356
    %1453 = vst [vmem:[#allocation7 + $0x2f8] sm:$0xff] %v1357
    // Predicated region
    $region22: #{tpu_custom_call.1} parent=1 // pred_check
      _
    $region23: #{tpu_custom_call.1} parent=1 // pred_check_branch
      %1455 = sbr.rel (0) target = $region25
    $region24: #{tpu_custom_call.1} parent=1 // pred_region
      %s1457 = ssub.s32 12288, 12288
      %1458 = vsyncadd [#allocation4], %s1457
      %s1459 = sshll.u32 [#allocation7], 4
      %s1460 = int_to_ptr.vmem [resolvable:$true] %s1459
      %1465 = dma.vmem_to_hbm [thread:$0]  %s1460, 12288, %s2, [#allocation4], 256, 256, 16
    $region25: #{tpu_custom_call.1} parent=1 // pred_fallthru
      _
    // Predicated region
    $region26: #{tpu_custom_call.1} parent=1 // pred_check
      _
    $region27: #{tpu_custom_call.1} parent=1 // pred_check_branch
      %1467 = sbr.rel (0) target = $region29
    $region28: #{tpu_custom_call.1} parent=1 // pred_region
      %1468 = dma.done [#allocation4], 12288
    $region29: #{tpu_custom_call.1} parent=1 // pred_fallthru
      _
    %1469 = vsyncpa [#allocation3], 1
    %1470 = vsyncpa [#allocation6], 1
    %1471 = vsyncpa [#allocation4], 1

</llo_original>
